<compile_context>
chip_gen: v5e
topology: v5e:2x2
jax: 0.10.0
libtpu: 0.0.40
codegen_flags: <defaults>
</compile_context>

<pallas_src>
import jax
import jax.numpy as jnp
from jax.experimental import pallas as pl
from jax.experimental.pallas import tpu as pltpu

# ---- problem sizes (small, consistent with the module: c1 divisible by ratio) ----
B = 2
C = 32            # c1
RATIO = 16
HID = C // RATIO  # hidden planes of the channel-attention MLP (= 2)
H = 16
W = 16
HW = H * W        # 256 -> lane-dense (multiple of 128)
KS = 7            # spatial-attention kernel size
PAD = 3           # padding for kernel_size == 7


def _roll_lanes(x, shift):
    """Static lane roll along the last axis; skip the op entirely for shift == 0."""
    return x if shift == 0 else pltpu.roll(x, shift, axis=1)


def cbam_kernel(x_ref, w1t_ref, w2_ref, wsp_ref, o_ref):
    """One batch element per grid step; everything lane-dense over HW = 256.

    x_ref  : (C, HW)     VMEM  input slab
    w1t_ref: (C, HID)    VMEM  f1 weight transposed (w1t[c, j] = W1[j, c])
    w2_ref : (C, HID)    VMEM  f2 weight            (w2[c, j]  = W2[c, j])
    wsp_ref: (2, KS*KS)  VMEM  7x7 spatial conv weight, flattened taps
    o_ref  : (C, HW)     VMEM  output slab
    """
    xb = x_ref[...]                                            # (C, HW)

    # ---------------- channel attention ----------------
    avg_c = jnp.sum(xb, axis=1, keepdims=True) * (1.0 / HW)    # (C, 1)
    max_c = jnp.max(xb, axis=1, keepdims=True)                 # (C, 1)

    w1t = w1t_ref[...]                                         # (C, HID)
    w2 = w2_ref[...]                                           # (C, HID)

    def mlp(p):  # (C,1) -> (C,1): 1x1 conv -> relu -> 1x1 conv (no bias)
        h = jnp.maximum(jnp.sum(w1t * p, axis=0, keepdims=True), 0.0)  # (1, HID)
        return jnp.sum(w2 * h, axis=1, keepdims=True)                  # (C, 1)

    ca = jax.nn.sigmoid(mlp(avg_c) + mlp(max_c))               # (C, 1)
    out1 = xb * ca                                             # (C, HW)

    # ---------------- spatial attention ----------------
    avg_row = jnp.mean(out1, axis=0, keepdims=True)            # (1, HW)
    max_row = jnp.max(out1, axis=0, keepdims=True)             # (1, HW)

    # Stack the two maps as one (2, HW) slab so every conv op covers both
    # conv input channels at once (row 0 = mean map, row 1 = max map).
    row_id = jax.lax.broadcasted_iota(jnp.int32, (2, HW), 0)
    sp = jnp.where(row_id == 0, avg_row, max_row)              # (2, HW)

    # Flat-index coordinate helpers for the conv's zero-padding border masks.
    lane = jax.lax.broadcasted_iota(jnp.int32, (1, HW), 1)
    if W & (W - 1) == 0:  # W is a power of two here
        xs = jnp.bitwise_and(lane, W - 1)
        ys = jnp.right_shift(lane, W.bit_length() - 1)
    else:
        xs = lane % W
        ys = lane // W

    wsp = wsp_ref[...]                                         # (2, KS*KS)

    # 7x7 "same" conv with zero padding, done directly on the flattened
    # lane-dense maps: tap (dy, dx) == lane-roll by -(dy*W + dx) plus border
    # masks evaluated on the *output* coordinates.  The x-shifted/masked
    # copies are hoisted and shared across all 7 dy values, so the conv uses
    # only 12 lane rolls instead of 98 unaligned window loads.
    x_shifted = []
    for dxi in range(KS):
        dx = dxi - PAD
        xmask = (xs + dx >= 0) & (xs + dx < W)                 # (1, HW) bool
        shifted = _roll_lanes(sp, (-dx) % HW)                  # (2, HW)
        x_shifted.append(jnp.where(xmask, shifted, 0.0))

    partials = []
    for dyi in range(KS):
        dy = dyi - PAD
        # Independent per-dy accumulation chain (7 chains fill the VALU slots
        # instead of one serial 98-op chain).
        k0 = dyi * KS
        s = wsp[:, k0:k0 + 1] * x_shifted[0]
        for dxi in range(1, KS):
            k = k0 + dxi
            s = s + wsp[:, k:k + 1] * x_shifted[dxi]
        ymask = (ys + dy >= 0) & (ys + dy < H)
        rolled = _roll_lanes(s, (-dy * W) % HW)
        partials.append(jnp.where(ymask, rolled, 0.0))

    # Tree-sum the 7 per-dy partials, then reduce the 2 conv input channels.
    conv2 = ((partials[0] + partials[1]) + (partials[2] + partials[3])) + \
            ((partials[4] + partials[5]) + partials[6])        # (2, HW)
    conv = jnp.sum(conv2, axis=0, keepdims=True)               # (1, HW)

    sa = jax.nn.sigmoid(conv)                                  # (1, HW)
    o_ref[...] = out1 * sa                                     # broadcast over channels


def cbam_pallas(x, w1, w2, wsp):
    """x: (B,C,H,W) f32; w1: (HID,C); w2: (C,HID); wsp: (1,2,KS,KS)."""
    # Lane-dense layout: fold the spatial dims so the last (lane) dim is 256.
    x2 = x.reshape(B, C, HW)
    w1t = jnp.transpose(w1, (1, 0))            # (C, HID)
    wsp_flat = wsp.reshape(2, KS * KS)         # (2, 49)

    grid_spec = pltpu.PrefetchScalarGridSpec(
        num_scalar_prefetch=0,
        grid=(B,),
        in_specs=[
            pl.BlockSpec((None, C, HW), lambda b: (b, 0, 0)),  # x (batch squeezed)
            pl.BlockSpec((C, HID), lambda b: (0, 0)),          # w1t (constant block)
            pl.BlockSpec((C, HID), lambda b: (0, 0)),          # w2  (constant block)
            pl.BlockSpec((2, KS * KS), lambda b: (0, 0)),      # spatial conv weight
        ],
        out_specs=pl.BlockSpec((None, C, HW), lambda b: (b, 0, 0)),
    )
    out = pl.pallas_call(
        cbam_kernel,
        out_shape=jax.ShapeDtypeStruct((B, C, HW), jnp.float32),
        grid_spec=grid_spec,
        # Parallel batch axis: v7x shards B=2 across its two TensorCores; on
        # single-TC v5e/v6e this is a short serial loop (could be folded).
        compiler_params=pltpu.CompilerParams(dimension_semantics=("parallel",)),
    )(x2, w1t, w2, wsp_flat)
    return out.reshape(B, C, H, W)


def cbam_ref(x, w1, w2, wsp):
    """Pure-JAX reference of the PyTorch CBAM forward (NCHW)."""
    avg_c = jnp.mean(x, axis=(2, 3), keepdims=True)
    max_c = jnp.max(x, axis=(2, 3), keepdims=True)

    def mlp(p):
        h = jax.nn.relu(jnp.einsum("oc,bcij->boij", w1, p))
        return jnp.einsum("co,boij->bcij", w2, h)

    ca = jax.nn.sigmoid(mlp(avg_c) + mlp(max_c))
    out1 = ca * x
    avg_s = jnp.mean(out1, axis=1, keepdims=True)
    max_s = jnp.max(out1, axis=1, keepdims=True)
    sp = jnp.concatenate([avg_s, max_s], axis=1)
    conv = jax.lax.conv_general_dilated(
        sp, wsp, window_strides=(1, 1), padding=[(PAD, PAD), (PAD, PAD)],
        dimension_numbers=("NCHW", "OIHW", "NCHW"))
    return jax.nn.sigmoid(conv) * out1


if __name__ == "__main__":
    key = jax.random.PRNGKey(0)
    kx, k1, k2, k3 = jax.random.split(key, 4)

    x = jax.random.normal(kx, (B, C, H, W), jnp.float32)
    # Deterministic synthetic parameters (shapes from the module's __init__):
    #   f1: Conv2d(C, C//ratio, 1, bias=False) -> weight (HID, C, 1, 1) -> (HID, C)
    #   f2: Conv2d(C//ratio, C, 1, bias=False) -> weight (C, HID, 1, 1) -> (C, HID)
    #   spatial conv: Conv2d(2, 1, 7, padding=3, bias=False) -> (1, 2, 7, 7)
    w1 = jax.random.normal(k1, (HID, C), jnp.float32) * (1.0 / jnp.sqrt(C))
    w2 = jax.random.normal(k2, (C, HID), jnp.float32) * (1.0 / jnp.sqrt(HID))
    wsp = jax.random.normal(k3, (1, 2, KS, KS), jnp.float32) * 0.1

    out = cbam_pallas(x, w1, w2, wsp)
    jax.block_until_ready(out)

    ref = cbam_ref(x, w1, w2, wsp)
    assert out.shape == (B, C, H, W)
    max_err = float(jnp.max(jnp.abs(out - ref)))
    if max_err > 1e-4:
        raise AssertionError(f"Pallas kernel mismatch vs reference: max_err={max_err}")

    print("KERNEL_OK")
</pallas_src>

<mosaic_0001>
module attributes {stable_mosaic.version = 11 : i64} {
  func.func @cbam_kernel(%arg0: i32, %arg1: memref<1x32x256xf32, #tpu.memory_space<vmem>>, %arg2: memref<32x2xf32, #tpu.memory_space<vmem>>, %arg3: memref<32x2xf32, #tpu.memory_space<vmem>>, %arg4: memref<2x49xf32, #tpu.memory_space<vmem>>, %arg5: memref<1x32x256xf32, #tpu.memory_space<vmem>>) attributes {dimension_semantics = [#tpu.dimension_semantics<parallel>], iteration_bounds = array<i64: 2>, scalar_prefetch = 0 : i64, scratch_operands = 0 : i64, tpu.core_type = #tpu.core_type<tc>, window_params = [{transform_indices = @transform_0, window_bounds = array<i64: 1, 32, 256>}, {pipeline_mode = #tpu.pipeline_mode<synchronous>, transform_indices = @transform_1, window_bounds = array<i64: 32, 2>}, {pipeline_mode = #tpu.pipeline_mode<synchronous>, transform_indices = @transform_2, window_bounds = array<i64: 32, 2>}, {pipeline_mode = #tpu.pipeline_mode<synchronous>, transform_indices = @transform_3, window_bounds = array<i64: 2, 49>}, {transform_indices = @transform_4, window_bounds = array<i64: 1, 32, 256>}]} {
    %c0 = arith.constant 0 : index
    %c0_0 = arith.constant 0 : index
    %c0_1 = arith.constant 0 : index
    %0 = vector.load %arg1[%c0, %c0_0, %c0_1] : memref<1x32x256xf32, #tpu.memory_space<vmem>>, vector<1x32x256xf32>
    %1 = vector.shape_cast %0 : vector<1x32x256xf32> to vector<32x256xf32>
    %cst = arith.constant dense<0.000000e+00> : vector<32xf32>
    %2 = vector.multi_reduction <add>, %1, %cst [1] : vector<32x256xf32> to vector<32xf32>
    %3 = vector.shape_cast %2 : vector<32xf32> to vector<32x1xf32>
    %cst_2 = arith.constant 3.906250e-03 : f32
    %4 = vector.broadcast %cst_2 : f32 to vector<32x1xf32>
    %5 = arith.mulf %3, %4 : vector<32x1xf32>
    %cst_3 = arith.constant dense<0xFF800000> : vector<32xf32>
    %6 = vector.multi_reduction <maximumf>, %1, %cst_3 [1] : vector<32x256xf32> to vector<32xf32>
    %7 = vector.shape_cast %6 : vector<32xf32> to vector<32x1xf32>
    %c0_4 = arith.constant 0 : index
    %c0_5 = arith.constant 0 : index
    %8 = vector.load %arg2[%c0_4, %c0_5] : memref<32x2xf32, #tpu.memory_space<vmem>>, vector<32x2xf32>
    %c0_6 = arith.constant 0 : index
    %c0_7 = arith.constant 0 : index
    %9 = vector.load %arg3[%c0_6, %c0_7] : memref<32x2xf32, #tpu.memory_space<vmem>>, vector<32x2xf32>
    %10 = vector.broadcast %5 : vector<32x1xf32> to vector<32x2xf32>
    %11 = arith.mulf %8, %10 : vector<32x2xf32>
    %cst_8 = arith.constant dense<0.000000e+00> : vector<2xf32>
    %12 = vector.multi_reduction <add>, %11, %cst_8 [0] : vector<32x2xf32> to vector<2xf32>
    %13 = vector.shape_cast %12 : vector<2xf32> to vector<1x2xf32>
    %cst_9 = arith.constant 0.000000e+00 : f32
    %14 = vector.broadcast %cst_9 : f32 to vector<1x2xf32>
    %15 = arith.maximumf %13, %14 : vector<1x2xf32>
    %16 = vector.broadcast %15 : vector<1x2xf32> to vector<32x2xf32>
    %17 = arith.mulf %9, %16 : vector<32x2xf32>
    %cst_10 = arith.constant dense<0.000000e+00> : vector<32xf32>
    %18 = vector.multi_reduction <add>, %17, %cst_10 [1] : vector<32x2xf32> to vector<32xf32>
    %19 = vector.shape_cast %18 : vector<32xf32> to vector<32x1xf32>
    %20 = vector.broadcast %7 : vector<32x1xf32> to vector<32x2xf32>
    %21 = arith.mulf %8, %20 : vector<32x2xf32>
    %cst_11 = arith.constant dense<0.000000e+00> : vector<2xf32>
    %22 = vector.multi_reduction <add>, %21, %cst_11 [0] : vector<32x2xf32> to vector<2xf32>
    %23 = vector.shape_cast %22 : vector<2xf32> to vector<1x2xf32>
    %cst_12 = arith.constant 0.000000e+00 : f32
    %24 = vector.broadcast %cst_12 : f32 to vector<1x2xf32>
    %25 = arith.maximumf %23, %24 : vector<1x2xf32>
    %26 = vector.broadcast %25 : vector<1x2xf32> to vector<32x2xf32>
    %27 = arith.mulf %9, %26 : vector<32x2xf32>
    %cst_13 = arith.constant dense<0.000000e+00> : vector<32xf32>
    %28 = vector.multi_reduction <add>, %27, %cst_13 [1] : vector<32x2xf32> to vector<32xf32>
    %29 = vector.shape_cast %28 : vector<32xf32> to vector<32x1xf32>
    %30 = arith.addf %19, %29 : vector<32x1xf32>
    %31 = arith.negf %30 : vector<32x1xf32>
    %32 = math.exp %31 : vector<32x1xf32>
    %cst_14 = arith.constant 1.000000e+00 : f32
    %33 = vector.broadcast %cst_14 : f32 to vector<32x1xf32>
    %34 = arith.addf %33, %32 : vector<32x1xf32>
    %35 = arith.divf %33, %34 : vector<32x1xf32>
    %36 = vector.broadcast %35 : vector<32x1xf32> to vector<32x256xf32>
    %37 = arith.mulf %1, %36 : vector<32x256xf32>
    %cst_15 = arith.constant dense<0.000000e+00> : vector<256xf32>
    %38 = vector.multi_reduction <add>, %37, %cst_15 [0] : vector<32x256xf32> to vector<256xf32>
    %39 = vector.shape_cast %38 : vector<256xf32> to vector<1x256xf32>
    %cst_16 = arith.constant 3.200000e+01 : f32
    %40 = vector.broadcast %cst_16 : f32 to vector<1x256xf32>
    %41 = arith.divf %39, %40 : vector<1x256xf32>
    %cst_17 = arith.constant dense<0xFF800000> : vector<256xf32>
    %42 = vector.multi_reduction <maximumf>, %37, %cst_17 [0] : vector<32x256xf32> to vector<256xf32>
    %43 = vector.shape_cast %42 : vector<256xf32> to vector<1x256xf32>
    %44 = tpu.iota {dimensions = array<i32: 0>} : vector<2x256xi32>
    %c0_i32 = arith.constant 0 : i32
    %45 = vector.broadcast %c0_i32 : i32 to vector<2x256xi32>
    %46 = arith.cmpi eq, %44, %45 : vector<2x256xi32>
    %47 = vector.shape_cast %41 : vector<1x256xf32> to vector<1x256xf32>
    %48 = vector.broadcast %47 : vector<1x256xf32> to vector<2x256xf32>
    %49 = vector.shape_cast %43 : vector<1x256xf32> to vector<1x256xf32>
    %50 = vector.broadcast %49 : vector<1x256xf32> to vector<2x256xf32>
    %51 = arith.select %46, %48, %50 : vector<2x256xi1>, vector<2x256xf32>
    %52 = tpu.iota {dimensions = array<i32: 1>} : vector<1x256xi32>
    %c15_i32 = arith.constant 15 : i32
    %53 = vector.broadcast %c15_i32 : i32 to vector<1x256xi32>
    %54 = arith.andi %52, %53 : vector<1x256xi32>
    %c4_i32 = arith.constant 4 : i32
    %55 = vector.broadcast %c4_i32 : i32 to vector<1x256xi32>
    %56 = arith.shrsi %52, %55 : vector<1x256xi32>
    %c0_18 = arith.constant 0 : index
    %c0_19 = arith.constant 0 : index
    %57 = vector.load %arg4[%c0_18, %c0_19] : memref<2x49xf32, #tpu.memory_space<vmem>>, vector<2x49xf32>
    %c-3_i32 = arith.constant -3 : i32
    %58 = vector.broadcast %c-3_i32 : i32 to vector<1x256xi32>
    %59 = arith.addi %54, %58 : vector<1x256xi32>
    %c0_i32_20 = arith.constant 0 : i32
    %60 = vector.broadcast %c0_i32_20 : i32 to vector<1x256xi32>
    %61 = arith.cmpi sge, %59, %60 : vector<1x256xi32>
    %c-3_i32_21 = arith.constant -3 : i32
    %62 = vector.broadcast %c-3_i32_21 : i32 to vector<1x256xi32>
    %63 = arith.addi %54, %62 : vector<1x256xi32>
    %c16_i32 = arith.constant 16 : i32
    %64 = vector.broadcast %c16_i32 : i32 to vector<1x256xi32>
    %65 = arith.cmpi slt, %63, %64 : vector<1x256xi32>
    %66 = arith.andi %61, %65 : vector<1x256xi1>
    %c3_i32 = arith.constant 3 : i32
    %67 = tpu.dynamic_rotate %51 by %c3_i32 dim 1 : vector<2x256xf32>, i32 -> vector<2x256xf32>
    %cst_22 = arith.constant 0.000000e+00 : f32
    %68 = vector.shape_cast %66 : vector<1x256xi1> to vector<1x256xi1>
    %69 = vector.broadcast %68 : vector<1x256xi1> to vector<2x256xi1>
    %70 = vector.broadcast %cst_22 : f32 to vector<2x256xf32>
    %71 = arith.select %69, %67, %70 : vector<2x256xi1>, vector<2x256xf32>
    %c-2_i32 = arith.constant -2 : i32
    %72 = vector.broadcast %c-2_i32 : i32 to vector<1x256xi32>
    %73 = arith.addi %54, %72 : vector<1x256xi32>
    %c0_i32_23 = arith.constant 0 : i32
    %74 = vector.broadcast %c0_i32_23 : i32 to vector<1x256xi32>
    %75 = arith.cmpi sge, %73, %74 : vector<1x256xi32>
    %c-2_i32_24 = arith.constant -2 : i32
    %76 = vector.broadcast %c-2_i32_24 : i32 to vector<1x256xi32>
    %77 = arith.addi %54, %76 : vector<1x256xi32>
    %c16_i32_25 = arith.constant 16 : i32
    %78 = vector.broadcast %c16_i32_25 : i32 to vector<1x256xi32>
    %79 = arith.cmpi slt, %77, %78 : vector<1x256xi32>
    %80 = arith.andi %75, %79 : vector<1x256xi1>
    %c2_i32 = arith.constant 2 : i32
    %81 = tpu.dynamic_rotate %51 by %c2_i32 dim 1 : vector<2x256xf32>, i32 -> vector<2x256xf32>
    %cst_26 = arith.constant 0.000000e+00 : f32
    %82 = vector.shape_cast %80 : vector<1x256xi1> to vector<1x256xi1>
    %83 = vector.broadcast %82 : vector<1x256xi1> to vector<2x256xi1>
    %84 = vector.broadcast %cst_26 : f32 to vector<2x256xf32>
    %85 = arith.select %83, %81, %84 : vector<2x256xi1>, vector<2x256xf32>
    %c-1_i32 = arith.constant -1 : i32
    %86 = vector.broadcast %c-1_i32 : i32 to vector<1x256xi32>
    %87 = arith.addi %54, %86 : vector<1x256xi32>
    %c0_i32_27 = arith.constant 0 : i32
    %88 = vector.broadcast %c0_i32_27 : i32 to vector<1x256xi32>
    %89 = arith.cmpi sge, %87, %88 : vector<1x256xi32>
    %c-1_i32_28 = arith.constant -1 : i32
    %90 = vector.broadcast %c-1_i32_28 : i32 to vector<1x256xi32>
    %91 = arith.addi %54, %90 : vector<1x256xi32>
    %c16_i32_29 = arith.constant 16 : i32
    %92 = vector.broadcast %c16_i32_29 : i32 to vector<1x256xi32>
    %93 = arith.cmpi slt, %91, %92 : vector<1x256xi32>
    %94 = arith.andi %89, %93 : vector<1x256xi1>
    %c1_i32 = arith.constant 1 : i32
    %95 = tpu.dynamic_rotate %51 by %c1_i32 dim 1 : vector<2x256xf32>, i32 -> vector<2x256xf32>
    %cst_30 = arith.constant 0.000000e+00 : f32
    %96 = vector.shape_cast %94 : vector<1x256xi1> to vector<1x256xi1>
    %97 = vector.broadcast %96 : vector<1x256xi1> to vector<2x256xi1>
    %98 = vector.broadcast %cst_30 : f32 to vector<2x256xf32>
    %99 = arith.select %97, %95, %98 : vector<2x256xi1>, vector<2x256xf32>
    %c0_i32_31 = arith.constant 0 : i32
    %100 = vector.broadcast %c0_i32_31 : i32 to vector<1x256xi32>
    %101 = arith.addi %54, %100 : vector<1x256xi32>
    %c0_i32_32 = arith.constant 0 : i32
    %102 = vector.broadcast %c0_i32_32 : i32 to vector<1x256xi32>
    %103 = arith.cmpi sge, %101, %102 : vector<1x256xi32>
    %c0_i32_33 = arith.constant 0 : i32
    %104 = vector.broadcast %c0_i32_33 : i32 to vector<1x256xi32>
    %105 = arith.addi %54, %104 : vector<1x256xi32>
    %c16_i32_34 = arith.constant 16 : i32
    %106 = vector.broadcast %c16_i32_34 : i32 to vector<1x256xi32>
    %107 = arith.cmpi slt, %105, %106 : vector<1x256xi32>
    %108 = arith.andi %103, %107 : vector<1x256xi1>
    %cst_35 = arith.constant 0.000000e+00 : f32
    %109 = vector.shape_cast %108 : vector<1x256xi1> to vector<1x256xi1>
    %110 = vector.broadcast %109 : vector<1x256xi1> to vector<2x256xi1>
    %111 = vector.broadcast %cst_35 : f32 to vector<2x256xf32>
    %112 = arith.select %110, %51, %111 : vector<2x256xi1>, vector<2x256xf32>
    %c1_i32_36 = arith.constant 1 : i32
    %113 = vector.broadcast %c1_i32_36 : i32 to vector<1x256xi32>
    %114 = arith.addi %54, %113 : vector<1x256xi32>
    %c0_i32_37 = arith.constant 0 : i32
    %115 = vector.broadcast %c0_i32_37 : i32 to vector<1x256xi32>
    %116 = arith.cmpi sge, %114, %115 : vector<1x256xi32>
    %c1_i32_38 = arith.constant 1 : i32
    %117 = vector.broadcast %c1_i32_38 : i32 to vector<1x256xi32>
    %118 = arith.addi %54, %117 : vector<1x256xi32>
    %c16_i32_39 = arith.constant 16 : i32
    %119 = vector.broadcast %c16_i32_39 : i32 to vector<1x256xi32>
    %120 = arith.cmpi slt, %118, %119 : vector<1x256xi32>
    %121 = arith.andi %116, %120 : vector<1x256xi1>
    %c255_i32 = arith.constant 255 : i32
    %122 = tpu.dynamic_rotate %51 by %c255_i32 dim 1 : vector<2x256xf32>, i32 -> vector<2x256xf32>
    %cst_40 = arith.constant 0.000000e+00 : f32
    %123 = vector.shape_cast %121 : vector<1x256xi1> to vector<1x256xi1>
    %124 = vector.broadcast %123 : vector<1x256xi1> to vector<2x256xi1>
    %125 = vector.broadcast %cst_40 : f32 to vector<2x256xf32>
    %126 = arith.select %124, %122, %125 : vector<2x256xi1>, vector<2x256xf32>
    %c2_i32_41 = arith.constant 2 : i32
    %127 = vector.broadcast %c2_i32_41 : i32 to vector<1x256xi32>
    %128 = arith.addi %54, %127 : vector<1x256xi32>
    %c0_i32_42 = arith.constant 0 : i32
    %129 = vector.broadcast %c0_i32_42 : i32 to vector<1x256xi32>
    %130 = arith.cmpi sge, %128, %129 : vector<1x256xi32>
    %c2_i32_43 = arith.constant 2 : i32
    %131 = vector.broadcast %c2_i32_43 : i32 to vector<1x256xi32>
    %132 = arith.addi %54, %131 : vector<1x256xi32>
    %c16_i32_44 = arith.constant 16 : i32
    %133 = vector.broadcast %c16_i32_44 : i32 to vector<1x256xi32>
    %134 = arith.cmpi slt, %132, %133 : vector<1x256xi32>
    %135 = arith.andi %130, %134 : vector<1x256xi1>
    %c254_i32 = arith.constant 254 : i32
    %136 = tpu.dynamic_rotate %51 by %c254_i32 dim 1 : vector<2x256xf32>, i32 -> vector<2x256xf32>
    %cst_45 = arith.constant 0.000000e+00 : f32
    %137 = vector.shape_cast %135 : vector<1x256xi1> to vector<1x256xi1>
    %138 = vector.broadcast %137 : vector<1x256xi1> to vector<2x256xi1>
    %139 = vector.broadcast %cst_45 : f32 to vector<2x256xf32>
    %140 = arith.select %138, %136, %139 : vector<2x256xi1>, vector<2x256xf32>
    %c3_i32_46 = arith.constant 3 : i32
    %141 = vector.broadcast %c3_i32_46 : i32 to vector<1x256xi32>
    %142 = arith.addi %54, %141 : vector<1x256xi32>
    %c0_i32_47 = arith.constant 0 : i32
    %143 = vector.broadcast %c0_i32_47 : i32 to vector<1x256xi32>
    %144 = arith.cmpi sge, %142, %143 : vector<1x256xi32>
    %c3_i32_48 = arith.constant 3 : i32
    %145 = vector.broadcast %c3_i32_48 : i32 to vector<1x256xi32>
    %146 = arith.addi %54, %145 : vector<1x256xi32>
    %c16_i32_49 = arith.constant 16 : i32
    %147 = vector.broadcast %c16_i32_49 : i32 to vector<1x256xi32>
    %148 = arith.cmpi slt, %146, %147 : vector<1x256xi32>
    %149 = arith.andi %144, %148 : vector<1x256xi1>
    %c253_i32 = arith.constant 253 : i32
    %150 = tpu.dynamic_rotate %51 by %c253_i32 dim 1 : vector<2x256xf32>, i32 -> vector<2x256xf32>
    %cst_50 = arith.constant 0.000000e+00 : f32
    %151 = vector.shape_cast %149 : vector<1x256xi1> to vector<1x256xi1>
    %152 = vector.broadcast %151 : vector<1x256xi1> to vector<2x256xi1>
    %153 = vector.broadcast %cst_50 : f32 to vector<2x256xf32>
    %154 = arith.select %152, %150, %153 : vector<2x256xi1>, vector<2x256xf32>
    %155 = vector.extract_strided_slice %57 {offsets = [0, 0], sizes = [2, 1], strides = [1, 1]} : vector<2x49xf32> to vector<2x1xf32>
    %156 = vector.broadcast %155 : vector<2x1xf32> to vector<2x256xf32>
    %157 = arith.mulf %156, %71 : vector<2x256xf32>
    %158 = vector.extract_strided_slice %57 {offsets = [0, 1], sizes = [2, 1], strides = [1, 1]} : vector<2x49xf32> to vector<2x1xf32>
    %159 = vector.broadcast %158 : vector<2x1xf32> to vector<2x256xf32>
    %160 = arith.mulf %159, %85 : vector<2x256xf32>
    %161 = arith.addf %157, %160 : vector<2x256xf32>
    %162 = vector.extract_strided_slice %57 {offsets = [0, 2], sizes = [2, 1], strides = [1, 1]} : vector<2x49xf32> to vector<2x1xf32>
    %163 = vector.broadcast %162 : vector<2x1xf32> to vector<2x256xf32>
    %164 = arith.mulf %163, %99 : vector<2x256xf32>
    %165 = arith.addf %161, %164 : vector<2x256xf32>
    %166 = vector.extract_strided_slice %57 {offsets = [0, 3], sizes = [2, 1], strides = [1, 1]} : vector<2x49xf32> to vector<2x1xf32>
    %167 = vector.broadcast %166 : vector<2x1xf32> to vector<2x256xf32>
    %168 = arith.mulf %167, %112 : vector<2x256xf32>
    %169 = arith.addf %165, %168 : vector<2x256xf32>
    %170 = vector.extract_strided_slice %57 {offsets = [0, 4], sizes = [2, 1], strides = [1, 1]} : vector<2x49xf32> to vector<2x1xf32>
    %171 = vector.broadcast %170 : vector<2x1xf32> to vector<2x256xf32>
    %172 = arith.mulf %171, %126 : vector<2x256xf32>
    %173 = arith.addf %169, %172 : vector<2x256xf32>
    %174 = vector.extract_strided_slice %57 {offsets = [0, 5], sizes = [2, 1], strides = [1, 1]} : vector<2x49xf32> to vector<2x1xf32>
    %175 = vector.broadcast %174 : vector<2x1xf32> to vector<2x256xf32>
    %176 = arith.mulf %175, %140 : vector<2x256xf32>
    %177 = arith.addf %173, %176 : vector<2x256xf32>
    %178 = vector.extract_strided_slice %57 {offsets = [0, 6], sizes = [2, 1], strides = [1, 1]} : vector<2x49xf32> to vector<2x1xf32>
    %179 = vector.broadcast %178 : vector<2x1xf32> to vector<2x256xf32>
    %180 = arith.mulf %179, %154 : vector<2x256xf32>
    %181 = arith.addf %177, %180 : vector<2x256xf32>
    %c-3_i32_51 = arith.constant -3 : i32
    %182 = vector.broadcast %c-3_i32_51 : i32 to vector<1x256xi32>
    %183 = arith.addi %56, %182 : vector<1x256xi32>
    %c0_i32_52 = arith.constant 0 : i32
    %184 = vector.broadcast %c0_i32_52 : i32 to vector<1x256xi32>
    %185 = arith.cmpi sge, %183, %184 : vector<1x256xi32>
    %c-3_i32_53 = arith.constant -3 : i32
    %186 = vector.broadcast %c-3_i32_53 : i32 to vector<1x256xi32>
    %187 = arith.addi %56, %186 : vector<1x256xi32>
    %c16_i32_54 = arith.constant 16 : i32
    %188 = vector.broadcast %c16_i32_54 : i32 to vector<1x256xi32>
    %189 = arith.cmpi slt, %187, %188 : vector<1x256xi32>
    %190 = arith.andi %185, %189 : vector<1x256xi1>
    %c48_i32 = arith.constant 48 : i32
    %191 = tpu.dynamic_rotate %181 by %c48_i32 dim 1 : vector<2x256xf32>, i32 -> vector<2x256xf32>
    %cst_55 = arith.constant 0.000000e+00 : f32
    %192 = vector.shape_cast %190 : vector<1x256xi1> to vector<1x256xi1>
    %193 = vector.broadcast %192 : vector<1x256xi1> to vector<2x256xi1>
    %194 = vector.broadcast %cst_55 : f32 to vector<2x256xf32>
    %195 = arith.select %193, %191, %194 : vector<2x256xi1>, vector<2x256xf32>
    %196 = vector.extract_strided_slice %57 {offsets = [0, 7], sizes = [2, 1], strides = [1, 1]} : vector<2x49xf32> to vector<2x1xf32>
    %197 = vector.broadcast %196 : vector<2x1xf32> to vector<2x256xf32>
    %198 = arith.mulf %197, %71 : vector<2x256xf32>
    %199 = vector.extract_strided_slice %57 {offsets = [0, 8], sizes = [2, 1], strides = [1, 1]} : vector<2x49xf32> to vector<2x1xf32>
    %200 = vector.broadcast %199 : vector<2x1xf32> to vector<2x256xf32>
    %201 = arith.mulf %200, %85 : vector<2x256xf32>
    %202 = arith.addf %198, %201 : vector<2x256xf32>
    %203 = vector.extract_strided_slice %57 {offsets = [0, 9], sizes = [2, 1], strides = [1, 1]} : vector<2x49xf32> to vector<2x1xf32>
    %204 = vector.broadcast %203 : vector<2x1xf32> to vector<2x256xf32>
    %205 = arith.mulf %204, %99 : vector<2x256xf32>
    %206 = arith.addf %202, %205 : vector<2x256xf32>
    %207 = vector.extract_strided_slice %57 {offsets = [0, 10], sizes = [2, 1], strides = [1, 1]} : vector<2x49xf32> to vector<2x1xf32>
    %208 = vector.broadcast %207 : vector<2x1xf32> to vector<2x256xf32>
    %209 = arith.mulf %208, %112 : vector<2x256xf32>
    %210 = arith.addf %206, %209 : vector<2x256xf32>
    %211 = vector.extract_strided_slice %57 {offsets = [0, 11], sizes = [2, 1], strides = [1, 1]} : vector<2x49xf32> to vector<2x1xf32>
    %212 = vector.broadcast %211 : vector<2x1xf32> to vector<2x256xf32>
    %213 = arith.mulf %212, %126 : vector<2x256xf32>
    %214 = arith.addf %210, %213 : vector<2x256xf32>
    %215 = vector.extract_strided_slice %57 {offsets = [0, 12], sizes = [2, 1], strides = [1, 1]} : vector<2x49xf32> to vector<2x1xf32>
    %216 = vector.broadcast %215 : vector<2x1xf32> to vector<2x256xf32>
    %217 = arith.mulf %216, %140 : vector<2x256xf32>
    %218 = arith.addf %214, %217 : vector<2x256xf32>
    %219 = vector.extract_strided_slice %57 {offsets = [0, 13], sizes = [2, 1], strides = [1, 1]} : vector<2x49xf32> to vector<2x1xf32>
    %220 = vector.broadcast %219 : vector<2x1xf32> to vector<2x256xf32>
    %221 = arith.mulf %220, %154 : vector<2x256xf32>
    %222 = arith.addf %218, %221 : vector<2x256xf32>
    %c-2_i32_56 = arith.constant -2 : i32
    %223 = vector.broadcast %c-2_i32_56 : i32 to vector<1x256xi32>
    %224 = arith.addi %56, %223 : vector<1x256xi32>
    %c0_i32_57 = arith.constant 0 : i32
    %225 = vector.broadcast %c0_i32_57 : i32 to vector<1x256xi32>
    %226 = arith.cmpi sge, %224, %225 : vector<1x256xi32>
    %c-2_i32_58 = arith.constant -2 : i32
    %227 = vector.broadcast %c-2_i32_58 : i32 to vector<1x256xi32>
    %228 = arith.addi %56, %227 : vector<1x256xi32>
    %c16_i32_59 = arith.constant 16 : i32
    %229 = vector.broadcast %c16_i32_59 : i32 to vector<1x256xi32>
    %230 = arith.cmpi slt, %228, %229 : vector<1x256xi32>
    %231 = arith.andi %226, %230 : vector<1x256xi1>
    %c32_i32 = arith.constant 32 : i32
    %232 = tpu.dynamic_rotate %222 by %c32_i32 dim 1 : vector<2x256xf32>, i32 -> vector<2x256xf32>
    %cst_60 = arith.constant 0.000000e+00 : f32
    %233 = vector.shape_cast %231 : vector<1x256xi1> to vector<1x256xi1>
    %234 = vector.broadcast %233 : vector<1x256xi1> to vector<2x256xi1>
    %235 = vector.broadcast %cst_60 : f32 to vector<2x256xf32>
    %236 = arith.select %234, %232, %235 : vector<2x256xi1>, vector<2x256xf32>
    %237 = vector.extract_strided_slice %57 {offsets = [0, 14], sizes = [2, 1], strides = [1, 1]} : vector<2x49xf32> to vector<2x1xf32>
    %238 = vector.broadcast %237 : vector<2x1xf32> to vector<2x256xf32>
    %239 = arith.mulf %238, %71 : vector<2x256xf32>
    %240 = vector.extract_strided_slice %57 {offsets = [0, 15], sizes = [2, 1], strides = [1, 1]} : vector<2x49xf32> to vector<2x1xf32>
    %241 = vector.broadcast %240 : vector<2x1xf32> to vector<2x256xf32>
    %242 = arith.mulf %241, %85 : vector<2x256xf32>
    %243 = arith.addf %239, %242 : vector<2x256xf32>
    %244 = vector.extract_strided_slice %57 {offsets = [0, 16], sizes = [2, 1], strides = [1, 1]} : vector<2x49xf32> to vector<2x1xf32>
    %245 = vector.broadcast %244 : vector<2x1xf32> to vector<2x256xf32>
    %246 = arith.mulf %245, %99 : vector<2x256xf32>
    %247 = arith.addf %243, %246 : vector<2x256xf32>
    %248 = vector.extract_strided_slice %57 {offsets = [0, 17], sizes = [2, 1], strides = [1, 1]} : vector<2x49xf32> to vector<2x1xf32>
    %249 = vector.broadcast %248 : vector<2x1xf32> to vector<2x256xf32>
    %250 = arith.mulf %249, %112 : vector<2x256xf32>
    %251 = arith.addf %247, %250 : vector<2x256xf32>
    %252 = vector.extract_strided_slice %57 {offsets = [0, 18], sizes = [2, 1], strides = [1, 1]} : vector<2x49xf32> to vector<2x1xf32>
    %253 = vector.broadcast %252 : vector<2x1xf32> to vector<2x256xf32>
    %254 = arith.mulf %253, %126 : vector<2x256xf32>
    %255 = arith.addf %251, %254 : vector<2x256xf32>
    %256 = vector.extract_strided_slice %57 {offsets = [0, 19], sizes = [2, 1], strides = [1, 1]} : vector<2x49xf32> to vector<2x1xf32>
    %257 = vector.broadcast %256 : vector<2x1xf32> to vector<2x256xf32>
    %258 = arith.mulf %257, %140 : vector<2x256xf32>
    %259 = arith.addf %255, %258 : vector<2x256xf32>
    %260 = vector.extract_strided_slice %57 {offsets = [0, 20], sizes = [2, 1], strides = [1, 1]} : vector<2x49xf32> to vector<2x1xf32>
    %261 = vector.broadcast %260 : vector<2x1xf32> to vector<2x256xf32>
    %262 = arith.mulf %261, %154 : vector<2x256xf32>
    %263 = arith.addf %259, %262 : vector<2x256xf32>
    %c-1_i32_61 = arith.constant -1 : i32
    %264 = vector.broadcast %c-1_i32_61 : i32 to vector<1x256xi32>
    %265 = arith.addi %56, %264 : vector<1x256xi32>
    %c0_i32_62 = arith.constant 0 : i32
    %266 = vector.broadcast %c0_i32_62 : i32 to vector<1x256xi32>
    %267 = arith.cmpi sge, %265, %266 : vector<1x256xi32>
    %c-1_i32_63 = arith.constant -1 : i32
    %268 = vector.broadcast %c-1_i32_63 : i32 to vector<1x256xi32>
    %269 = arith.addi %56, %268 : vector<1x256xi32>
    %c16_i32_64 = arith.constant 16 : i32
    %270 = vector.broadcast %c16_i32_64 : i32 to vector<1x256xi32>
    %271 = arith.cmpi slt, %269, %270 : vector<1x256xi32>
    %272 = arith.andi %267, %271 : vector<1x256xi1>
    %c16_i32_65 = arith.constant 16 : i32
    %273 = tpu.dynamic_rotate %263 by %c16_i32_65 dim 1 : vector<2x256xf32>, i32 -> vector<2x256xf32>
    %cst_66 = arith.constant 0.000000e+00 : f32
    %274 = vector.shape_cast %272 : vector<1x256xi1> to vector<1x256xi1>
    %275 = vector.broadcast %274 : vector<1x256xi1> to vector<2x256xi1>
    %276 = vector.broadcast %cst_66 : f32 to vector<2x256xf32>
    %277 = arith.select %275, %273, %276 : vector<2x256xi1>, vector<2x256xf32>
    %278 = vector.extract_strided_slice %57 {offsets = [0, 21], sizes = [2, 1], strides = [1, 1]} : vector<2x49xf32> to vector<2x1xf32>
    %279 = vector.broadcast %278 : vector<2x1xf32> to vector<2x256xf32>
    %280 = arith.mulf %279, %71 : vector<2x256xf32>
    %281 = vector.extract_strided_slice %57 {offsets = [0, 22], sizes = [2, 1], strides = [1, 1]} : vector<2x49xf32> to vector<2x1xf32>
    %282 = vector.broadcast %281 : vector<2x1xf32> to vector<2x256xf32>
    %283 = arith.mulf %282, %85 : vector<2x256xf32>
    %284 = arith.addf %280, %283 : vector<2x256xf32>
    %285 = vector.extract_strided_slice %57 {offsets = [0, 23], sizes = [2, 1], strides = [1, 1]} : vector<2x49xf32> to vector<2x1xf32>
    %286 = vector.broadcast %285 : vector<2x1xf32> to vector<2x256xf32>
    %287 = arith.mulf %286, %99 : vector<2x256xf32>
    %288 = arith.addf %284, %287 : vector<2x256xf32>
    %289 = vector.extract_strided_slice %57 {offsets = [0, 24], sizes = [2, 1], strides = [1, 1]} : vector<2x49xf32> to vector<2x1xf32>
    %290 = vector.broadcast %289 : vector<2x1xf32> to vector<2x256xf32>
    %291 = arith.mulf %290, %112 : vector<2x256xf32>
    %292 = arith.addf %288, %291 : vector<2x256xf32>
    %293 = vector.extract_strided_slice %57 {offsets = [0, 25], sizes = [2, 1], strides = [1, 1]} : vector<2x49xf32> to vector<2x1xf32>
    %294 = vector.broadcast %293 : vector<2x1xf32> to vector<2x256xf32>
    %295 = arith.mulf %294, %126 : vector<2x256xf32>
    %296 = arith.addf %292, %295 : vector<2x256xf32>
    %297 = vector.extract_strided_slice %57 {offsets = [0, 26], sizes = [2, 1], strides = [1, 1]} : vector<2x49xf32> to vector<2x1xf32>
    %298 = vector.broadcast %297 : vector<2x1xf32> to vector<2x256xf32>
    %299 = arith.mulf %298, %140 : vector<2x256xf32>
    %300 = arith.addf %296, %299 : vector<2x256xf32>
    %301 = vector.extract_strided_slice %57 {offsets = [0, 27], sizes = [2, 1], strides = [1, 1]} : vector<2x49xf32> to vector<2x1xf32>
    %302 = vector.broadcast %301 : vector<2x1xf32> to vector<2x256xf32>
    %303 = arith.mulf %302, %154 : vector<2x256xf32>
    %304 = arith.addf %300, %303 : vector<2x256xf32>
    %c0_i32_67 = arith.constant 0 : i32
    %305 = vector.broadcast %c0_i32_67 : i32 to vector<1x256xi32>
    %306 = arith.addi %56, %305 : vector<1x256xi32>
    %c0_i32_68 = arith.constant 0 : i32
    %307 = vector.broadcast %c0_i32_68 : i32 to vector<1x256xi32>
    %308 = arith.cmpi sge, %306, %307 : vector<1x256xi32>
    %c0_i32_69 = arith.constant 0 : i32
    %309 = vector.broadcast %c0_i32_69 : i32 to vector<1x256xi32>
    %310 = arith.addi %56, %309 : vector<1x256xi32>
    %c16_i32_70 = arith.constant 16 : i32
    %311 = vector.broadcast %c16_i32_70 : i32 to vector<1x256xi32>
    %312 = arith.cmpi slt, %310, %311 : vector<1x256xi32>
    %313 = arith.andi %308, %312 : vector<1x256xi1>
    %cst_71 = arith.constant 0.000000e+00 : f32
    %314 = vector.shape_cast %313 : vector<1x256xi1> to vector<1x256xi1>
    %315 = vector.broadcast %314 : vector<1x256xi1> to vector<2x256xi1>
    %316 = vector.broadcast %cst_71 : f32 to vector<2x256xf32>
    %317 = arith.select %315, %304, %316 : vector<2x256xi1>, vector<2x256xf32>
    %318 = vector.extract_strided_slice %57 {offsets = [0, 28], sizes = [2, 1], strides = [1, 1]} : vector<2x49xf32> to vector<2x1xf32>
    %319 = vector.broadcast %318 : vector<2x1xf32> to vector<2x256xf32>
    %320 = arith.mulf %319, %71 : vector<2x256xf32>
    %321 = vector.extract_strided_slice %57 {offsets = [0, 29], sizes = [2, 1], strides = [1, 1]} : vector<2x49xf32> to vector<2x1xf32>
    %322 = vector.broadcast %321 : vector<2x1xf32> to vector<2x256xf32>
    %323 = arith.mulf %322, %85 : vector<2x256xf32>
    %324 = arith.addf %320, %323 : vector<2x256xf32>
    %325 = vector.extract_strided_slice %57 {offsets = [0, 30], sizes = [2, 1], strides = [1, 1]} : vector<2x49xf32> to vector<2x1xf32>
    %326 = vector.broadcast %325 : vector<2x1xf32> to vector<2x256xf32>
    %327 = arith.mulf %326, %99 : vector<2x256xf32>
    %328 = arith.addf %324, %327 : vector<2x256xf32>
    %329 = vector.extract_strided_slice %57 {offsets = [0, 31], sizes = [2, 1], strides = [1, 1]} : vector<2x49xf32> to vector<2x1xf32>
    %330 = vector.broadcast %329 : vector<2x1xf32> to vector<2x256xf32>
    %331 = arith.mulf %330, %112 : vector<2x256xf32>
    %332 = arith.addf %328, %331 : vector<2x256xf32>
    %333 = vector.extract_strided_slice %57 {offsets = [0, 32], sizes = [2, 1], strides = [1, 1]} : vector<2x49xf32> to vector<2x1xf32>
    %334 = vector.broadcast %333 : vector<2x1xf32> to vector<2x256xf32>
    %335 = arith.mulf %334, %126 : vector<2x256xf32>
    %336 = arith.addf %332, %335 : vector<2x256xf32>
    %337 = vector.extract_strided_slice %57 {offsets = [0, 33], sizes = [2, 1], strides = [1, 1]} : vector<2x49xf32> to vector<2x1xf32>
    %338 = vector.broadcast %337 : vector<2x1xf32> to vector<2x256xf32>
    %339 = arith.mulf %338, %140 : vector<2x256xf32>
    %340 = arith.addf %336, %339 : vector<2x256xf32>
    %341 = vector.extract_strided_slice %57 {offsets = [0, 34], sizes = [2, 1], strides = [1, 1]} : vector<2x49xf32> to vector<2x1xf32>
    %342 = vector.broadcast %341 : vector<2x1xf32> to vector<2x256xf32>
    %343 = arith.mulf %342, %154 : vector<2x256xf32>
    %344 = arith.addf %340, %343 : vector<2x256xf32>
    %c1_i32_72 = arith.constant 1 : i32
    %345 = vector.broadcast %c1_i32_72 : i32 to vector<1x256xi32>
    %346 = arith.addi %56, %345 : vector<1x256xi32>
    %c0_i32_73 = arith.constant 0 : i32
    %347 = vector.broadcast %c0_i32_73 : i32 to vector<1x256xi32>
    %348 = arith.cmpi sge, %346, %347 : vector<1x256xi32>
    %c1_i32_74 = arith.constant 1 : i32
    %349 = vector.broadcast %c1_i32_74 : i32 to vector<1x256xi32>
    %350 = arith.addi %56, %349 : vector<1x256xi32>
    %c16_i32_75 = arith.constant 16 : i32
    %351 = vector.broadcast %c16_i32_75 : i32 to vector<1x256xi32>
    %352 = arith.cmpi slt, %350, %351 : vector<1x256xi32>
    %353 = arith.andi %348, %352 : vector<1x256xi1>
    %c240_i32 = arith.constant 240 : i32
    %354 = tpu.dynamic_rotate %344 by %c240_i32 dim 1 : vector<2x256xf32>, i32 -> vector<2x256xf32>
    %cst_76 = arith.constant 0.000000e+00 : f32
    %355 = vector.shape_cast %353 : vector<1x256xi1> to vector<1x256xi1>
    %356 = vector.broadcast %355 : vector<1x256xi1> to vector<2x256xi1>
    %357 = vector.broadcast %cst_76 : f32 to vector<2x256xf32>
    %358 = arith.select %356, %354, %357 : vector<2x256xi1>, vector<2x256xf32>
    %359 = vector.extract_strided_slice %57 {offsets = [0, 35], sizes = [2, 1], strides = [1, 1]} : vector<2x49xf32> to vector<2x1xf32>
    %360 = vector.broadcast %359 : vector<2x1xf32> to vector<2x256xf32>
    %361 = arith.mulf %360, %71 : vector<2x256xf32>
    %362 = vector.extract_strided_slice %57 {offsets = [0, 36], sizes = [2, 1], strides = [1, 1]} : vector<2x49xf32> to vector<2x1xf32>
    %363 = vector.broadcast %362 : vector<2x1xf32> to vector<2x256xf32>
    %364 = arith.mulf %363, %85 : vector<2x256xf32>
    %365 = arith.addf %361, %364 : vector<2x256xf32>
    %366 = vector.extract_strided_slice %57 {offsets = [0, 37], sizes = [2, 1], strides = [1, 1]} : vector<2x49xf32> to vector<2x1xf32>
    %367 = vector.broadcast %366 : vector<2x1xf32> to vector<2x256xf32>
    %368 = arith.mulf %367, %99 : vector<2x256xf32>
    %369 = arith.addf %365, %368 : vector<2x256xf32>
    %370 = vector.extract_strided_slice %57 {offsets = [0, 38], sizes = [2, 1], strides = [1, 1]} : vector<2x49xf32> to vector<2x1xf32>
    %371 = vector.broadcast %370 : vector<2x1xf32> to vector<2x256xf32>
    %372 = arith.mulf %371, %112 : vector<2x256xf32>
    %373 = arith.addf %369, %372 : vector<2x256xf32>
    %374 = vector.extract_strided_slice %57 {offsets = [0, 39], sizes = [2, 1], strides = [1, 1]} : vector<2x49xf32> to vector<2x1xf32>
    %375 = vector.broadcast %374 : vector<2x1xf32> to vector<2x256xf32>
    %376 = arith.mulf %375, %126 : vector<2x256xf32>
    %377 = arith.addf %373, %376 : vector<2x256xf32>
    %378 = vector.extract_strided_slice %57 {offsets = [0, 40], sizes = [2, 1], strides = [1, 1]} : vector<2x49xf32> to vector<2x1xf32>
    %379 = vector.broadcast %378 : vector<2x1xf32> to vector<2x256xf32>
    %380 = arith.mulf %379, %140 : vector<2x256xf32>
    %381 = arith.addf %377, %380 : vector<2x256xf32>
    %382 = vector.extract_strided_slice %57 {offsets = [0, 41], sizes = [2, 1], strides = [1, 1]} : vector<2x49xf32> to vector<2x1xf32>
    %383 = vector.broadcast %382 : vector<2x1xf32> to vector<2x256xf32>
    %384 = arith.mulf %383, %154 : vector<2x256xf32>
    %385 = arith.addf %381, %384 : vector<2x256xf32>
    %c2_i32_77 = arith.constant 2 : i32
    %386 = vector.broadcast %c2_i32_77 : i32 to vector<1x256xi32>
    %387 = arith.addi %56, %386 : vector<1x256xi32>
    %c0_i32_78 = arith.constant 0 : i32
    %388 = vector.broadcast %c0_i32_78 : i32 to vector<1x256xi32>
    %389 = arith.cmpi sge, %387, %388 : vector<1x256xi32>
    %c2_i32_79 = arith.constant 2 : i32
    %390 = vector.broadcast %c2_i32_79 : i32 to vector<1x256xi32>
    %391 = arith.addi %56, %390 : vector<1x256xi32>
    %c16_i32_80 = arith.constant 16 : i32
    %392 = vector.broadcast %c16_i32_80 : i32 to vector<1x256xi32>
    %393 = arith.cmpi slt, %391, %392 : vector<1x256xi32>
    %394 = arith.andi %389, %393 : vector<1x256xi1>
    %c224_i32 = arith.constant 224 : i32
    %395 = tpu.dynamic_rotate %385 by %c224_i32 dim 1 : vector<2x256xf32>, i32 -> vector<2x256xf32>
    %cst_81 = arith.constant 0.000000e+00 : f32
    %396 = vector.shape_cast %394 : vector<1x256xi1> to vector<1x256xi1>
    %397 = vector.broadcast %396 : vector<1x256xi1> to vector<2x256xi1>
    %398 = vector.broadcast %cst_81 : f32 to vector<2x256xf32>
    %399 = arith.select %397, %395, %398 : vector<2x256xi1>, vector<2x256xf32>
    %400 = vector.extract_strided_slice %57 {offsets = [0, 42], sizes = [2, 1], strides = [1, 1]} : vector<2x49xf32> to vector<2x1xf32>
    %401 = vector.broadcast %400 : vector<2x1xf32> to vector<2x256xf32>
    %402 = arith.mulf %401, %71 : vector<2x256xf32>
    %403 = vector.extract_strided_slice %57 {offsets = [0, 43], sizes = [2, 1], strides = [1, 1]} : vector<2x49xf32> to vector<2x1xf32>
    %404 = vector.broadcast %403 : vector<2x1xf32> to vector<2x256xf32>
    %405 = arith.mulf %404, %85 : vector<2x256xf32>
    %406 = arith.addf %402, %405 : vector<2x256xf32>
    %407 = vector.extract_strided_slice %57 {offsets = [0, 44], sizes = [2, 1], strides = [1, 1]} : vector<2x49xf32> to vector<2x1xf32>
    %408 = vector.broadcast %407 : vector<2x1xf32> to vector<2x256xf32>
    %409 = arith.mulf %408, %99 : vector<2x256xf32>
    %410 = arith.addf %406, %409 : vector<2x256xf32>
    %411 = vector.extract_strided_slice %57 {offsets = [0, 45], sizes = [2, 1], strides = [1, 1]} : vector<2x49xf32> to vector<2x1xf32>
    %412 = vector.broadcast %411 : vector<2x1xf32> to vector<2x256xf32>
    %413 = arith.mulf %412, %112 : vector<2x256xf32>
    %414 = arith.addf %410, %413 : vector<2x256xf32>
    %415 = vector.extract_strided_slice %57 {offsets = [0, 46], sizes = [2, 1], strides = [1, 1]} : vector<2x49xf32> to vector<2x1xf32>
    %416 = vector.broadcast %415 : vector<2x1xf32> to vector<2x256xf32>
    %417 = arith.mulf %416, %126 : vector<2x256xf32>
    %418 = arith.addf %414, %417 : vector<2x256xf32>
    %419 = vector.extract_strided_slice %57 {offsets = [0, 47], sizes = [2, 1], strides = [1, 1]} : vector<2x49xf32> to vector<2x1xf32>
    %420 = vector.broadcast %419 : vector<2x1xf32> to vector<2x256xf32>
    %421 = arith.mulf %420, %140 : vector<2x256xf32>
    %422 = arith.addf %418, %421 : vector<2x256xf32>
    %423 = vector.extract_strided_slice %57 {offsets = [0, 48], sizes = [2, 1], strides = [1, 1]} : vector<2x49xf32> to vector<2x1xf32>
    %424 = vector.broadcast %423 : vector<2x1xf32> to vector<2x256xf32>
    %425 = arith.mulf %424, %154 : vector<2x256xf32>
    %426 = arith.addf %422, %425 : vector<2x256xf32>
    %c3_i32_82 = arith.constant 3 : i32
    %427 = vector.broadcast %c3_i32_82 : i32 to vector<1x256xi32>
    %428 = arith.addi %56, %427 : vector<1x256xi32>
    %c0_i32_83 = arith.constant 0 : i32
    %429 = vector.broadcast %c0_i32_83 : i32 to vector<1x256xi32>
    %430 = arith.cmpi sge, %428, %429 : vector<1x256xi32>
    %c3_i32_84 = arith.constant 3 : i32
    %431 = vector.broadcast %c3_i32_84 : i32 to vector<1x256xi32>
    %432 = arith.addi %56, %431 : vector<1x256xi32>
    %c16_i32_85 = arith.constant 16 : i32
    %433 = vector.broadcast %c16_i32_85 : i32 to vector<1x256xi32>
    %434 = arith.cmpi slt, %432, %433 : vector<1x256xi32>
    %435 = arith.andi %430, %434 : vector<1x256xi1>
    %c208_i32 = arith.constant 208 : i32
    %436 = tpu.dynamic_rotate %426 by %c208_i32 dim 1 : vector<2x256xf32>, i32 -> vector<2x256xf32>
    %cst_86 = arith.constant 0.000000e+00 : f32
    %437 = vector.shape_cast %435 : vector<1x256xi1> to vector<1x256xi1>
    %438 = vector.broadcast %437 : vector<1x256xi1> to vector<2x256xi1>
    %439 = vector.broadcast %cst_86 : f32 to vector<2x256xf32>
    %440 = arith.select %438, %436, %439 : vector<2x256xi1>, vector<2x256xf32>
    %441 = arith.addf %195, %236 : vector<2x256xf32>
    %442 = arith.addf %277, %317 : vector<2x256xf32>
    %443 = arith.addf %441, %442 : vector<2x256xf32>
    %444 = arith.addf %358, %399 : vector<2x256xf32>
    %445 = arith.addf %444, %440 : vector<2x256xf32>
    %446 = arith.addf %443, %445 : vector<2x256xf32>
    %cst_87 = arith.constant dense<0.000000e+00> : vector<256xf32>
    %447 = vector.multi_reduction <add>, %446, %cst_87 [0] : vector<2x256xf32> to vector<256xf32>
    %448 = vector.shape_cast %447 : vector<256xf32> to vector<1x256xf32>
    %449 = arith.negf %448 : vector<1x256xf32>
    %450 = math.exp %449 : vector<1x256xf32>
    %cst_88 = arith.constant 1.000000e+00 : f32
    %451 = vector.broadcast %cst_88 : f32 to vector<1x256xf32>
    %452 = arith.addf %451, %450 : vector<1x256xf32>
    %453 = arith.divf %451, %452 : vector<1x256xf32>
    %454 = vector.broadcast %453 : vector<1x256xf32> to vector<32x256xf32>
    %455 = arith.mulf %37, %454 : vector<32x256xf32>
    %c0_89 = arith.constant 0 : index
    %c0_90 = arith.constant 0 : index
    %c0_91 = arith.constant 0 : index
    %456 = vector.load %arg5[%c0_89, %c0_90, %c0_91] : memref<1x32x256xf32, #tpu.memory_space<vmem>>, vector<1x32x256xf32>
    %457 = vector.shape_cast %456 : vector<1x32x256xf32> to vector<32x256xf32>
    %458 = vector.shape_cast %455 : vector<32x256xf32> to vector<1x32x256xf32>
    tpu.vector_store %arg5[%c0_89, %c0_90, %c0_91], %458 {strides = array<i32>} : memref<1x32x256xf32, #tpu.memory_space<vmem>>, vector<1x32x256xf32>,
    return
  }
  func.func @transform_0(%arg0: i32) -> (i32, i32, i32) {
    %c0_i32 = arith.constant 0 : i32
    %c0_i32_0 = arith.constant 0 : i32
    %c0_i32_1 = arith.constant 0 : i32
    return %arg0, %c0_i32, %c0_i32_0 : i32, i32, i32
  }
  func.func @transform_1(%arg0: i32) -> (i32, i32) {
    %c0_i32 = arith.constant 0 : i32
    %c0_i32_0 = arith.constant 0 : i32
    %c0_i32_1 = arith.constant 0 : i32
    return %c0_i32, %c0_i32_0 : i32, i32
  }
  func.func @transform_2(%arg0: i32) -> (i32, i32) {
    %c0_i32 = arith.constant 0 : i32
    %c0_i32_0 = arith.constant 0 : i32
    %c0_i32_1 = arith.constant 0 : i32
    return %c0_i32, %c0_i32_0 : i32, i32
  }
  func.func @transform_3(%arg0: i32) -> (i32, i32) {
    %c0_i32 = arith.constant 0 : i32
    %c0_i32_0 = arith.constant 0 : i32
    %c0_i32_1 = arith.constant 0 : i32
    return %c0_i32, %c0_i32_0 : i32, i32
  }
  func.func @transform_4(%arg0: i32) -> (i32, i32, i32) {
    %c0_i32 = arith.constant 0 : i32
    %c0_i32_0 = arith.constant 0 : i32
    %c0_i32_1 = arith.constant 0 : i32
    return %arg0, %c0_i32, %c0_i32_0 : i32, i32, i32
  }
}

</mosaic_0001>

<llo_original>
// kernel: tpu_custom_call.1
$region0: #{tpu_custom_call.1}
  #allocation0 [shape = 'u32[]', space=smem, size = 0x4, offset = 0x4, fixed_abs, tag = 'smem constant byte address 0x4 - core index']
  #allocation1 [shape = 'u32[72,128]{1,0:T(1,128)}', space=vmem, size = 0x9000, scoped, tag = 'internal scratch']
  %s0 = inlined_call_operand.hbm [shape: f32[2,32,256], index: 0, kind: input, shape index: {}]
  %s1 = inlined_call_operand.vmem [shape: f32[32,2], index: 1, kind: input, shape index: {}]
  %s2 = inlined_call_operand.vmem [shape: f32[32,2], index: 2, kind: input, shape index: {}]
  %s3 = inlined_call_operand.vmem [shape: f32[2,49], index: 3, kind: input, shape index: {}]
  %s4 = inlined_call_operand.hbm [shape: f32[2,32,256], index: 4, kind: output, shape index: {}]
  %s5 = sld [smem:[#allocation0]]
  $region53: #{tpu_custom_call.1} parent=0
    _
  %s7 = ssub.s32 1, %s5
  %s8 = scalar_select 0, %s7, %s5
  $region1: #{tpu_custom_call.1} parent=0
    #allocation2 [shape = 'u8[65536]{0}', space=vmem, size = 0x10000, scoped, tag = 'input window, operand 0']
    #allocation3 [shape = 's32[2]{0}', space=sflag, size = 0x8, scoped, tag = 'scoped memory for tpu_custom_call.1']
    #allocation4 [shape = 's32[2]{0}', space=sflag, size = 0x8, scoped, tag = 'scoped memory for tpu_custom_call.1']
    #allocation5 [shape = 'u8[65536]{0}', space=vmem, size = 0x10000, scoped, tag = 'output window, operand 0']
    %9 = vsyncpa [#allocation3], 0
    %s10 = scalar_lea.sflag [#allocation3], 1
    %11 = vsyncpa %s10, 0
    %12 = vsyncpa [#allocation4], 0
    %s13 = scalar_lea.sflag [#allocation4], 1
    %14 = vsyncpa %s13, 0
    loop: start=0, step=1, limit=4
    $region2: #{tpu_custom_call.1} parent=1 // loop_pre_header
      _
    $region3: #{tpu_custom_call.1} parent=1 // loop_header
      %s16 = sphi 0, %s20
      %p17 = scmp.ge.s32.totalorder %s16, 4
      %s26 = sphi 0, %s28
      %s29 = sphi 0, %s26
      %s30 = sphi 0, %s29
      %s46 = sphi 0, %s30
      %s50 = sphi 0, %s50
      %s52 = sphi 0, %s50
      %s53 = sphi 0, %s52
      %s67 = sphi 0, %s53
      %s71 = sphi 0, %s71
      %s73 = sphi 0, %s71
      %s74 = sphi 0, %s73
      %s88 = sphi 0, %s74
      %s92 = sphi 0, %s92
      %s94 = sphi 0, %s92
      %s95 = sphi 0, %s94
      %s109 = sphi 0, %s95
      %s115 = sphi 0, %s117
      %s118 = sphi 0, %s115
      %s119 = sphi 0, %s118
      %s135 = sphi 0, %s119
    $region4: #{tpu_custom_call.1} parent=1 // loop_header_branch
      %19 = sbr.rel (%p17) target = $region8
    $region5: #{tpu_custom_call.1} parent=1 // loop_body
      %s21 = ssub.s32 %s16, 1
      %s22 = ssub.s32 %s16, 2
      %s23 = sadd.s32 %s16, 1
      %s24 = ssub.s32 %s16, %s23
      %p25 = scmp.eq.s32.totalorder %s24, 0
      %s27 = sadd.s32 %s26, 1
      %s28 = scalar_select %p25, %s26, %s27
      %p31 = pneg %p25
      %p32 = scmp.eq.s32.totalorder %s16, 1
      %p33 = por %p31, %p32
      %p34 = scmp.ne.s32.totalorder %s26, %s29
      %p35 = scmp.eq.s32.totalorder %s16, 0
      %p36 = por %p34, %p35
      %p37 = scmp.ne.s32.totalorder %s26, %s29
      %p38 = scmp.eq.s32.totalorder %s21, 1
      %p39 = por %p37, %p38
      %p40 = scmp.ne.s32.totalorder %s29, %s30
      %p41 = scmp.eq.s32.totalorder %s21, 0
      %p42 = por %p40, %p41
      %p43 = scmp.ne.s32.totalorder %s29, %s30
      %p44 = scmp.eq.s32.totalorder %s22, 1
      %p45 = por %p43, %p44
      %p47 = scmp.ne.s32.totalorder %s30, %s46
      %p48 = scmp.eq.s32.totalorder %s22, 0
      %p49 = por %p47, %p48
      %s51 = sadd.s32 %s50, 1
      %p54 = scmp.eq.s32.totalorder %s16, 1
      %p55 = scmp.ne.s32.totalorder %s50, %s52
      %p56 = scmp.eq.s32.totalorder %s16, 0
      %p57 = por %p55, %p56
      %p58 = scmp.ne.s32.totalorder %s50, %s52
      %p59 = scmp.eq.s32.totalorder %s21, 1
      %p60 = por %p58, %p59
      %p61 = scmp.ne.s32.totalorder %s52, %s53
      %p62 = scmp.eq.s32.totalorder %s21, 0
      %p63 = por %p61, %p62
      %p64 = scmp.ne.s32.totalorder %s52, %s53
      %p65 = scmp.eq.s32.totalorder %s22, 1
      %p66 = por %p64, %p65
      %p68 = scmp.ne.s32.totalorder %s53, %s67
      %p69 = scmp.eq.s32.totalorder %s22, 0
      %p70 = por %p68, %p69
      %s72 = sadd.s32 %s71, 1
      %p75 = scmp.eq.s32.totalorder %s16, 1
      %p76 = scmp.ne.s32.totalorder %s71, %s73
      %p77 = scmp.eq.s32.totalorder %s16, 0
      %p78 = por %p76, %p77
      %p79 = scmp.ne.s32.totalorder %s71, %s73
      %p80 = scmp.eq.s32.totalorder %s21, 1
      %p81 = por %p79, %p80
      %p82 = scmp.ne.s32.totalorder %s73, %s74
      %p83 = scmp.eq.s32.totalorder %s21, 0
      %p84 = por %p82, %p83
      %p85 = scmp.ne.s32.totalorder %s73, %s74
      %p86 = scmp.eq.s32.totalorder %s22, 1
      %p87 = por %p85, %p86
      %p89 = scmp.ne.s32.totalorder %s74, %s88
      %p90 = scmp.eq.s32.totalorder %s22, 0
      %p91 = por %p89, %p90
      %s93 = sadd.s32 %s92, 1
      %p96 = scmp.eq.s32.totalorder %s16, 1
      %p97 = scmp.ne.s32.totalorder %s92, %s94
      %p98 = scmp.eq.s32.totalorder %s16, 0
      %p99 = por %p97, %p98
      %p100 = scmp.ne.s32.totalorder %s92, %s94
      %p101 = scmp.eq.s32.totalorder %s21, 1
      %p102 = por %p100, %p101
      %p103 = scmp.ne.s32.totalorder %s94, %s95
      %p104 = scmp.eq.s32.totalorder %s21, 0
      %p105 = por %p103, %p104
      %p106 = scmp.ne.s32.totalorder %s94, %s95
      %p107 = scmp.eq.s32.totalorder %s22, 1
      %p108 = por %p106, %p107
      %p110 = scmp.ne.s32.totalorder %s95, %s109
      %p111 = scmp.eq.s32.totalorder %s22, 0
      %p112 = por %p110, %p111
      %s113 = ssub.s32 %s16, %s23
      %p114 = scmp.eq.s32.totalorder %s113, 0
      %s116 = sadd.s32 %s115, 1
      %s117 = scalar_select %p114, %s115, %s116
      %p120 = pneg %p114
      %p121 = scmp.eq.s32.totalorder %s16, 1
      %p122 = por %p120, %p121
      %p123 = scmp.ne.s32.totalorder %s115, %s118
      %p124 = scmp.eq.s32.totalorder %s16, 0
      %p125 = por %p123, %p124
      %p126 = scmp.ne.s32.totalorder %s115, %s118
      %p127 = scmp.eq.s32.totalorder %s21, 1
      %p128 = por %p126, %p127
      %p129 = scmp.ne.s32.totalorder %s118, %s119
      %p130 = scmp.eq.s32.totalorder %s21, 0
      %p131 = por %p129, %p130
      %p132 = scmp.ne.s32.totalorder %s118, %s119
      %p133 = scmp.eq.s32.totalorder %s22, 1
      %p134 = por %p132, %p133
      %p136 = scmp.ne.s32.totalorder %s119, %s135
      %p137 = scmp.eq.s32.totalorder %s22, 0
      %p138 = por %p136, %p137
      %p139 = scmp.le.s32.totalorder 1, %s16
      %p140 = scmp.lt.s32.totalorder %s16, 3
      %p141 = pnand %p139, %p140
      %p142 = pneg %p141
      // Predicated region
      $region9: #{tpu_custom_call.1} parent=5 // pred_check
        _
      $region10: #{tpu_custom_call.1} parent=5 // pred_check_branch
        %144 = sbr.rel (%p141) target = $region12
      $region11: #{tpu_custom_call.1} parent=5 // pred_region
        %s145 = ssub.s32 %s16, 1
        // Predicated region
        $region13: #{tpu_custom_call.1} parent=11 // pred_check
          %p146 = pneg %p63
        $region14: #{tpu_custom_call.1} parent=11 // pred_check_branch
          %148 = sbr.rel (%p146) target = $region16
        $region15: #{tpu_custom_call.1} parent=11 // pred_region
          _
        $region16: #{tpu_custom_call.1} parent=11 // pred_fallthru
          _
        // Predicated region
        $region17: #{tpu_custom_call.1} parent=11 // pred_check
          %p149 = pneg %p84
        $region18: #{tpu_custom_call.1} parent=11 // pred_check_branch
          %151 = sbr.rel (%p149) target = $region20
        $region19: #{tpu_custom_call.1} parent=11 // pred_region
          _
        $region20: #{tpu_custom_call.1} parent=11 // pred_fallthru
          _
        // Predicated region
        $region21: #{tpu_custom_call.1} parent=11 // pred_check
          %p152 = pneg %p105
        $region22: #{tpu_custom_call.1} parent=11 // pred_check_branch
          %154 = sbr.rel (%p152) target = $region24
        $region23: #{tpu_custom_call.1} parent=11 // pred_region
          _
        $region24: #{tpu_custom_call.1} parent=11 // pred_fallthru
          _
      $region12: #{tpu_custom_call.1} parent=5 // pred_fallthru
        _
      %p155 = scmp.lt.s32.totalorder %s16, 2
      // Predicated region
      $region25: #{tpu_custom_call.1} parent=5 // pred_check
        %p156 = pneg %p155
      $region26: #{tpu_custom_call.1} parent=5 // pred_check_branch
        %158 = sbr.rel (%p156) target = $region28
      $region27: #{tpu_custom_call.1} parent=5 // pred_region
        // Predicated region
        $region29: #{tpu_custom_call.1} parent=27 // pred_check
          %p159 = pneg %p36
        $region30: #{tpu_custom_call.1} parent=27 // pred_check_branch
          %161 = sbr.rel (%p159) target = $region32
        $region31: #{tpu_custom_call.1} parent=27 // pred_region
          %s162 = sand.u32 %s26, 1
          %s163 = scalar_lea.sflag [#allocation3], %s162
          %s164 = sand.u32 %s26, 1
          %s165 = smul.addr %s164, 64
          %s166 = scalar_lea.vmem [#allocation2], %s165
          %168 = vsyncadd %s163, 0
          %s169 = smul.addr %s16, 8
          %s170 = smul.addr %s169, 8
          %s171 = scalar_lea.hbm %s0, %s170
          %s172 = sshll.u32 %s171, 4
          %s173 = int_to_ptr.hbm [resolvable:$true] %s172
          %s174 = sshll.u32 %s166, 4
          %s175 = int_to_ptr.vmem [resolvable:$true] %s174
          %180 = dma.hbm_to_vmem [thread:$0]  %s173, 1024, %s175, %s163, 256, 256, 16
        $region32: #{tpu_custom_call.1} parent=27 // pred_fallthru
          _
      $region28: #{tpu_custom_call.1} parent=5 // pred_fallthru
        _
      %p181 = scmp.le.s32.totalorder 1, %s16
      %p182 = scmp.lt.s32.totalorder %s16, 3
      %p183 = pnand %p181, %p182
      %p184 = pneg %p183
      // Predicated region
      $region33: #{tpu_custom_call.1} parent=5 // pred_check
        _
      $region34: #{tpu_custom_call.1} parent=5 // pred_check_branch
        %186 = sbr.rel (%p183) target = $region36
      $region35: #{tpu_custom_call.1} parent=5 // pred_region
        %s187 = ssub.s32 %s16, 1
        %s188 = sand.u32 %s29, 1
        %s189 = scalar_lea.sflag [#allocation3], %s188
        %s190 = sand.u32 %s29, 1
        %s191 = smul.addr %s190, 64
        %s192 = scalar_lea.vmem [#allocation2], %s191
        // Predicated region
        $region37: #{tpu_custom_call.1} parent=35 // pred_check
          %p193 = pneg %p42
        $region38: #{tpu_custom_call.1} parent=35 // pred_check_branch
          %195 = sbr.rel (%p193) target = $region40
        $region39: #{tpu_custom_call.1} parent=35 // pred_region
          %197 = dma.done %s189, 1024
        $region40: #{tpu_custom_call.1} parent=35 // pred_fallthru
          _
        %s198 = sand.u32 %s29, 1
        %s199 = scalar_lea.sflag [#allocation3], %s198
        %s200 = sand.u32 %s29, 1
        %s201 = smul.addr %s200, 64
        %s202 = scalar_lea.vmem [#allocation2], %s201
        %p203 = pneg %p42
        %p204 = pneg %p39
        %p205 = pneg %p63
        %p206 = pneg %p60
        %p207 = pneg %p84
        %p208 = pneg %p81
        %p209 = pneg %p105
        %p210 = pneg %p102
        %p211 = pneg %p131
        %p212 = pneg %p128
        %s213 = sand.u32 %s118, 1
        %s214 = scalar_lea.sflag [#allocation4], %s213
        %s215 = sand.u32 %s118, 1
        %s216 = smul.addr %s215, 64
        %s217 = scalar_lea.vmem [#allocation5], %s216
        %v218 = vld [vmem:[%s192] sm:$0xff]
        %v219 = vld [vmem:[%s192 + $0x8] sm:$0xff]
        %v220 = vld [vmem:[%s192 + $0x10] sm:$0xff]
        %v221 = vld [vmem:[%s192 + $0x18] sm:$0xff]
        %v222 = vld [vmem:[%s192 + $0x20] sm:$0xff]
        %v223 = vld [vmem:[%s192 + $0x28] sm:$0xff]
        %v224 = vld [vmem:[%s192 + $0x30] sm:$0xff]
        %v225 = vld [vmem:[%s192 + $0x38] sm:$0xff]
        %v226 = vadd.f32 %v218, %v219
        %227 = vadd.xlane.f32.xlu0 %v226
        %v228 = vpop.xlane.xlu0 %227
        %v229 = vadd.f32 %v220, %v221
        %230 = vadd.xlane.f32.xlu0 %v229
        %v231 = vpop.xlane.xlu0 %230
        %v232 = vadd.f32 %v222, %v223
        %233 = vadd.xlane.f32.xlu0 %v232
        %v234 = vpop.xlane.xlu0 %233
        %v235 = vadd.f32 %v224, %v225
        %236 = vadd.xlane.f32.xlu0 %v235
        %v237 = vpop.xlane.xlu0 %236
        %v238 = vmul.f32 %v228, 0.00390625
        %v239 = vmul.f32 %v231, 0.00390625
        %v240 = vmul.f32 %v234, 0.00390625
        %v241 = vmul.f32 %v237, 0.00390625
        %v242 = vmax.f32 %v218, %v219
        %243 = vmax.xlane.f32.xlu0 %v242
        %v244 = vpop.xlane.xlu0 %243
        %v245 = vmax.f32 %v220, %v221
        %246 = vmax.xlane.f32.xlu0 %v245
        %v247 = vpop.xlane.xlu0 %246
        %v248 = vmax.f32 %v222, %v223
        %249 = vmax.xlane.f32.xlu0 %v248
        %v250 = vpop.xlane.xlu0 %249
        %v251 = vmax.f32 %v224, %v225
        %252 = vmax.xlane.f32.xlu0 %v251
        %v253 = vpop.xlane.xlu0 %252
        %v254 = vld [vmem:[%s1] sm:$0xff]
        %v255 = vld [vmem:[%s1 + $0x8] sm:$0xff]
        %v256 = vld [vmem:[%s1 + $0x10] sm:$0xff]
        %v257 = vld [vmem:[%s1 + $0x18] sm:$0xff]
        %v258 = vld [vmem:[%s2] sm:$0xff]
        %v259 = vld [vmem:[%s2 + $0x8] sm:$0xff]
        %v260 = vld [vmem:[%s2 + $0x10] sm:$0xff]
        %v261 = vld [vmem:[%s2 + $0x18] sm:$0xff]
        %v262 = vmul.f32 %v254, %v238
        %v263 = vmul.f32 %v255, %v239
        %v264 = vmul.f32 %v256, %v240
        %v265 = vmul.f32 %v257, %v241
        %vm266 = vcmask 15360
        %v267 = vsel %vm266, %v262, 0.0
        %v268 = vsel %vm266, %v263, 0.0
        %v269 = vadd.f32 %v267, %v268
        %v270 = vsel %vm266, %v264, 0.0
        %v271 = vadd.f32 %v269, %v270
        %v272 = vsel %vm266, %v265, 0.0
        %v273 = vadd.f32 %v271, %v272
        %v274 = vrot.slane %v273, 4
        %v275 = vadd.f32 %v273, %v274
        %v276 = vrot.slane %v275, 2
        %v277 = vadd.f32 %v275, %v276
        %v278 = vrot.slane %v277, 1
        %v279 = vadd.f32 %v277, %v278
        %v280 = vmax.f32 %v279, 0.0
        %v281 = vmul.f32 %v258, %v280
        %v282 = vmul.f32 %v259, %v280
        %v283 = vmul.f32 %v260, %v280
        %v284 = vmul.f32 %v261, %v280
        %v285 = vsel %vm266, %v281, 0.0
        %286 = vadd.xlane.f32.xlu0 %v285
        %v287 = vpop.xlane.xlu0 %286
        %v288 = vsel %vm266, %v282, 0.0
        %289 = vadd.xlane.f32.xlu0 %v288
        %v290 = vpop.xlane.xlu0 %289
        %v291 = vsel %vm266, %v283, 0.0
        %292 = vadd.xlane.f32.xlu0 %v291
        %v293 = vpop.xlane.xlu0 %292
        %v294 = vsel %vm266, %v284, 0.0
        %295 = vadd.xlane.f32.xlu0 %v294
        %v296 = vpop.xlane.xlu0 %295
        %v297 = vmul.f32 %v254, %v244
        %v298 = vmul.f32 %v255, %v247
        %v299 = vmul.f32 %v256, %v250
        %v300 = vmul.f32 %v257, %v253
        %v301 = vsel %vm266, %v297, 0.0
        %v302 = vsel %vm266, %v298, 0.0
        %v303 = vadd.f32 %v301, %v302
        %v304 = vsel %vm266, %v299, 0.0
        %v305 = vadd.f32 %v303, %v304
        %v306 = vsel %vm266, %v300, 0.0
        %v307 = vadd.f32 %v305, %v306
        %v308 = vrot.slane %v307, 4
        %v309 = vadd.f32 %v307, %v308
        %v310 = vrot.slane %v309, 2
        %v311 = vadd.f32 %v309, %v310
        %v312 = vrot.slane %v311, 1
        %v313 = vadd.f32 %v311, %v312
        %v314 = vmax.f32 %v313, 0.0
        %v315 = vmul.f32 %v258, %v314
        %v316 = vmul.f32 %v259, %v314
        %v317 = vmul.f32 %v260, %v314
        %v318 = vmul.f32 %v261, %v314
        %v319 = vsel %vm266, %v315, 0.0
        %320 = vadd.xlane.f32.xlu0 %v319
        %v321 = vpop.xlane.xlu0 %320
        %v322 = vsel %vm266, %v316, 0.0
        %323 = vadd.xlane.f32.xlu0 %v322
        %v324 = vpop.xlane.xlu0 %323
        %v325 = vsel %vm266, %v317, 0.0
        %326 = vadd.xlane.f32.xlu0 %v325
        %v327 = vpop.xlane.xlu0 %326
        %v328 = vsel %vm266, %v318, 0.0
        %329 = vadd.xlane.f32.xlu0 %v328
        %v330 = vpop.xlane.xlu0 %329
        %v331 = vadd.f32 %v287, %v321
        %v332 = vadd.f32 %v290, %v324
        %v333 = vadd.f32 %v293, %v327
        %v334 = vadd.f32 %v296, %v330
        %v335 = vxor.u32 %v331, 2147483648
        %v336 = vxor.u32 %v332, 2147483648
        %v337 = vxor.u32 %v333, 2147483648
        %v338 = vxor.u32 %v334, 2147483648
        %v339 = vmul.f32 %v335, 1.442695
        %v340 = vpow.pop %v339
        %v341 = vmul.f32 %v336, 1.442695
        %v342 = vpow.pop %v341
        %v343 = vmul.f32 %v337, 1.442695
        %v344 = vpow.pop %v343
        %v345 = vmul.f32 %v338, 1.442695
        %v346 = vpow.pop %v345
        %v347 = vadd.f32 %v340, 1.0
        %v348 = vadd.f32 %v342, 1.0
        %v349 = vadd.f32 %v344, 1.0
        %v350 = vadd.f32 %v346, 1.0
        %v351 = vrcp.pop %v347
        %v352 = vmul.f32 %v347, %v351
        %v353 = vsub.f32 1.0, %v352
        %v354 = vmul.f32 %v351, %v353
        %v355 = vadd.f32 %v351, %v354
        %vm356 = vweird.f32 %v347
        %vm357 = vweird.f32 %v351
        %vm358 = vmor %vm356, %vm357
        %v359 = vsel %vm358, %v351, %v355
        %v360 = vand.u32 2147483647, %v347
        %vm361 = vcmp.eq.f32.partialorder %v360, 8.507059e+37
        %v362 = vand.u32 %v347, 2147483648
        %v363 = vor.u32 1.1754944e-38, %v362
        %v364 = vsel %vm361, %v363, %v359
        %v365 = vmul.f32 1.0, %v364
        %v366 = vrcp.pop %v348
        %v367 = vmul.f32 %v348, %v366
        %v368 = vsub.f32 1.0, %v367
        %v369 = vmul.f32 %v366, %v368
        %v370 = vadd.f32 %v366, %v369
        %vm371 = vweird.f32 %v348
        %vm372 = vweird.f32 %v366
        %vm373 = vmor %vm371, %vm372
        %v374 = vsel %vm373, %v366, %v370
        %v375 = vand.u32 2147483647, %v348
        %vm376 = vcmp.eq.f32.partialorder %v375, 8.507059e+37
        %v377 = vand.u32 %v348, 2147483648
        %v378 = vor.u32 1.1754944e-38, %v377
        %v379 = vsel %vm376, %v378, %v374
        %v380 = vmul.f32 1.0, %v379
        %v381 = vrcp.pop %v349
        %v382 = vmul.f32 %v349, %v381
        %v383 = vsub.f32 1.0, %v382
        %v384 = vmul.f32 %v381, %v383
        %v385 = vadd.f32 %v381, %v384
        %vm386 = vweird.f32 %v349
        %vm387 = vweird.f32 %v381
        %vm388 = vmor %vm386, %vm387
        %v389 = vsel %vm388, %v381, %v385
        %v390 = vand.u32 2147483647, %v349
        %vm391 = vcmp.eq.f32.partialorder %v390, 8.507059e+37
        %v392 = vand.u32 %v349, 2147483648
        %v393 = vor.u32 1.1754944e-38, %v392
        %v394 = vsel %vm391, %v393, %v389
        %v395 = vmul.f32 1.0, %v394
        %v396 = vrcp.pop %v350
        %v397 = vmul.f32 %v350, %v396
        %v398 = vsub.f32 1.0, %v397
        %v399 = vmul.f32 %v396, %v398
        %v400 = vadd.f32 %v396, %v399
        %vm401 = vweird.f32 %v350
        %vm402 = vweird.f32 %v396
        %vm403 = vmor %vm401, %vm402
        %v404 = vsel %vm403, %v396, %v400
        %v405 = vand.u32 2147483647, %v350
        %vm406 = vcmp.eq.f32.partialorder %v405, 8.507059e+37
        %v407 = vand.u32 %v350, 2147483648
        %v408 = vor.u32 1.1754944e-38, %v407
        %v409 = vsel %vm406, %v408, %v404
        %v410 = vmul.f32 1.0, %v409
        %v411 = vmul.f32 %v218, %v365
        %v412 = vmul.f32 %v219, %v365
        %v413 = vmul.f32 %v220, %v380
        %v414 = vmul.f32 %v221, %v380
        %v415 = vmul.f32 %v222, %v395
        %v416 = vmul.f32 %v223, %v395
        %v417 = vmul.f32 %v224, %v410
        %v418 = vmul.f32 %v225, %v410
        %v419 = vadd.f32 %v411, %v413
        %v420 = vadd.f32 %v419, %v415
        %v421 = vadd.f32 %v420, %v417
        %v422 = vrot.slane %v421, 4
        %v423 = vadd.f32 %v421, %v422
        %v424 = vrot.slane %v423, 2
        %v425 = vadd.f32 %v423, %v424
        %v426 = vrot.slane %v425, 1
        %v427 = vadd.f32 %v425, %v426
        %v428 = vadd.f32 %v412, %v414
        %v429 = vadd.f32 %v428, %v416
        %v430 = vadd.f32 %v429, %v418
        %v431 = vrot.slane %v430, 4
        %v432 = vadd.f32 %v430, %v431
        %v433 = vrot.slane %v432, 2
        %v434 = vadd.f32 %v432, %v433
        %v435 = vrot.slane %v434, 1
        %v436 = vadd.f32 %v434, %v435
        %v437 = vrcp.pop 32.0
        %v438 = vmul.f32 32.0, %v437
        %v439 = vsub.f32 1.0, %v438
        %v440 = vmul.f32 %v437, %v439
        %v441 = vadd.f32 %v437, %v440
        %vm442 = vweird.f32 %v437
        %v443 = vsel %vm442, %v437, %v441
        %v444 = vmul.f32 %v427, %v443
        %v445 = vmul.f32 %v436, %v443
        %v446 = vmax.f32 %v411, %v415
        %v447 = vmax.f32 %v413, %v417
        %v448 = vmax.f32 %v446, %v447
        %v449 = vrot.slane %v448, 4
        %v450 = vmax.f32 %v448, %v449
        %v451 = vrot.slane %v450, 2
        %v452 = vmax.f32 %v450, %v451
        %v453 = vrot.slane %v452, 1
        %v454 = vmax.f32 %v452, %v453
        %v455 = vmax.f32 %v412, %v416
        %v456 = vmax.f32 %v414, %v418
        %v457 = vmax.f32 %v455, %v456
        %v458 = vrot.slane %v457, 4
        %v459 = vmax.f32 %v457, %v458
        %v460 = vrot.slane %v459, 2
        %v461 = vmax.f32 %v459, %v460
        %v462 = vrot.slane %v461, 1
        %v463 = vmax.f32 %v461, %v462
        %v464 = vlaneseq
        %v465 = vshrl.u32 %v464, 7
        %vm466 = vcmp.eq.s32.totalorder %v465, 0
        %v467 = vsel %vm466, %v444, %v454
        %v468 = vsel %vm466, %v445, %v463
        %v469 = vlaneseq
        %v470 = vand.u32 %v469, 127
        %v471 = vadd.s32 %v470, 128
        %v472 = vand.u32 %v470, 15
        %v473 = vand.u32 %v471, 15
        %v474 = vshra.s32 %v470, 4
        %v475 = vshra.s32 %v471, 4
        %v476 = vld [vmem:[%s3] sm:$0x3]
        %v477 = vadd.s32 %v472, 4294967293
        %v478 = vadd.s32 %v473, 4294967293
        %vm479 = vcmp.ge.s32.totalorder %v477, 0
        %vm480 = vcmp.ge.s32.totalorder %v478, 0
        %vm481 = vcmp.lt.s32.totalorder %v477, 16
        %vm482 = vcmp.lt.s32.totalorder %v478, 16
        %vm483 = vmand %vm479, %vm481
        %vm484 = vmand %vm480, %vm482
        %485 = vrot.lane.b32.xlu0 %v467, 3
        %v486 = vpop.permute.xlu0 %485
        %487 = vrot.lane.b32.xlu0 %v468, 3
        %v488 = vpop.permute.xlu0 %487
        %vm489 = vcmp.lt.s32.totalorder %v470, 3
        %v490 = vsel %vm489, %v486, %v488
        %v491 = vsel %vm489, %v488, %v486
        %v492 = vsel %vm483, 1, 0
        %v493 = vsel %vm484, 1, 0
        %vm494 = vcmp.eq.s32.totalorder %v492, 1
        %vm495 = vcmp.eq.s32.totalorder %v493, 1
        %v496 = vsel %vm494, %v491, 0.0
        %v497 = vsel %vm495, %v490, 0.0
        %v498 = vadd.s32 %v472, 4294967294
        %v499 = vadd.s32 %v473, 4294967294
        %vm500 = vcmp.ge.s32.totalorder %v498, 0
        %vm501 = vcmp.ge.s32.totalorder %v499, 0
        %vm502 = vcmp.lt.s32.totalorder %v498, 16
        %vm503 = vcmp.lt.s32.totalorder %v499, 16
        %vm504 = vmand %vm500, %vm502
        %vm505 = vmand %vm501, %vm503
        %506 = vrot.lane.b32.xlu0 %v467, 2
        %v507 = vpop.permute.xlu0 %506
        %508 = vrot.lane.b32.xlu0 %v468, 2
        %v509 = vpop.permute.xlu0 %508
        %vm510 = vcmp.lt.s32.totalorder %v470, 2
        %v511 = vsel %vm510, %v507, %v509
        %v512 = vsel %vm510, %v509, %v507
        %v513 = vsel %vm504, 1, 0
        %v514 = vsel %vm505, 1, 0
        %vm515 = vcmp.eq.s32.totalorder %v513, 1
        %vm516 = vcmp.eq.s32.totalorder %v514, 1
        %v517 = vsel %vm515, %v512, 0.0
        %v518 = vsel %vm516, %v511, 0.0
        %v519 = vadd.s32 %v472, 4294967295
        %v520 = vadd.s32 %v473, 4294967295
        %vm521 = vcmp.ge.s32.totalorder %v519, 0
        %vm522 = vcmp.ge.s32.totalorder %v520, 0
        %vm523 = vcmp.lt.s32.totalorder %v519, 16
        %vm524 = vcmp.lt.s32.totalorder %v520, 16
        %vm525 = vmand %vm521, %vm523
        %vm526 = vmand %vm522, %vm524
        %527 = vrot.lane.b32.xlu0 %v467, 1
        %v528 = vpop.permute.xlu0 %527
        %529 = vrot.lane.b32.xlu0 %v468, 1
        %v530 = vpop.permute.xlu0 %529
        %vm531 = vcmp.lt.s32.totalorder %v470, 1
        %v532 = vsel %vm531, %v528, %v530
        %v533 = vsel %vm531, %v530, %v528
        %v534 = vsel %vm525, 1, 0
        %v535 = vsel %vm526, 1, 0
        %vm536 = vcmp.eq.s32.totalorder %v534, 1
        %vm537 = vcmp.eq.s32.totalorder %v535, 1
        %v538 = vsel %vm536, %v533, 0.0
        %v539 = vsel %vm537, %v532, 0.0
        %vm540 = vcmp.ge.s32.totalorder %v472, 0
        %vm541 = vcmp.ge.s32.totalorder %v473, 0
        %vm542 = vcmp.lt.s32.totalorder %v472, 16
        %vm543 = vcmp.lt.s32.totalorder %v473, 16
        %vm544 = vmand %vm540, %vm542
        %vm545 = vmand %vm541, %vm543
        %v546 = vsel %vm544, 1, 0
        %v547 = vsel %vm545, 1, 0
        %vm548 = vcmp.eq.s32.totalorder %v546, 1
        %vm549 = vcmp.eq.s32.totalorder %v547, 1
        %v550 = vsel %vm548, %v467, 0.0
        %v551 = vsel %vm549, %v468, 0.0
        %v552 = vadd.s32 %v472, 1
        %v553 = vadd.s32 %v473, 1
        %vm554 = vcmp.ge.s32.totalorder %v552, 0
        %vm555 = vcmp.ge.s32.totalorder %v553, 0
        %vm556 = vcmp.lt.s32.totalorder %v552, 16
        %vm557 = vcmp.lt.s32.totalorder %v553, 16
        %vm558 = vmand %vm554, %vm556
        %vm559 = vmand %vm555, %vm557
        %560 = vrot.lane.b32.xlu0 %v467, 127
        %v561 = vpop.permute.xlu0 %560
        %562 = vrot.lane.b32.xlu0 %v468, 127
        %v563 = vpop.permute.xlu0 %562
        %vm564 = vcmp.lt.s32.totalorder %v470, 127
        %v565 = vsel %vm564, %v561, %v563
        %v566 = vsel %vm564, %v563, %v561
        %v567 = vsel %vm558, 1, 0
        %v568 = vsel %vm559, 1, 0
        %vm569 = vcmp.eq.s32.totalorder %v567, 1
        %vm570 = vcmp.eq.s32.totalorder %v568, 1
        %v571 = vsel %vm569, %v565, 0.0
        %v572 = vsel %vm570, %v566, 0.0
        %v573 = vadd.s32 %v472, 2
        %v574 = vadd.s32 %v473, 2
        %vm575 = vcmp.ge.s32.totalorder %v573, 0
        %vm576 = vcmp.ge.s32.totalorder %v574, 0
        %vm577 = vcmp.lt.s32.totalorder %v573, 16
        %vm578 = vcmp.lt.s32.totalorder %v574, 16
        %vm579 = vmand %vm575, %vm577
        %vm580 = vmand %vm576, %vm578
        %581 = vrot.lane.b32.xlu0 %v467, 126
        %v582 = vpop.permute.xlu0 %581
        %583 = vrot.lane.b32.xlu0 %v468, 126
        %v584 = vpop.permute.xlu0 %583
        %vm585 = vcmp.lt.s32.totalorder %v470, 126
        %v586 = vsel %vm585, %v582, %v584
        %v587 = vsel %vm585, %v584, %v582
        %v588 = vsel %vm579, 1, 0
        %v589 = vsel %vm580, 1, 0
        %vm590 = vcmp.eq.s32.totalorder %v588, 1
        %vm591 = vcmp.eq.s32.totalorder %v589, 1
        %v592 = vsel %vm590, %v586, 0.0
        %v593 = vsel %vm591, %v587, 0.0
        %v594 = vadd.s32 %v472, 3
        %v595 = vadd.s32 %v473, 3
        %vm596 = vcmp.ge.s32.totalorder %v594, 0
        %vm597 = vcmp.ge.s32.totalorder %v595, 0
        %vm598 = vcmp.lt.s32.totalorder %v594, 16
        %vm599 = vcmp.lt.s32.totalorder %v595, 16
        %vm600 = vmand %vm596, %vm598
        %vm601 = vmand %vm597, %vm599
        %602 = vrot.lane.b32.xlu0 %v467, 125
        %v603 = vpop.permute.xlu0 %602
        %604 = vrot.lane.b32.xlu0 %v468, 125
        %v605 = vpop.permute.xlu0 %604
        %vm606 = vcmp.lt.s32.totalorder %v470, 125
        %v607 = vsel %vm606, %v603, %v605
        %v608 = vsel %vm606, %v605, %v603
        %v609 = vsel %vm600, 1, 0
        %v610 = vsel %vm601, 1, 0
        %vm611 = vcmp.eq.s32.totalorder %v609, 1
        %vm612 = vcmp.eq.s32.totalorder %v610, 1
        %v613 = vsel %vm611, %v607, 0.0
        %v614 = vsel %vm612, %v608, 0.0
        %616 = vset.pattern.permute.xlu0 0
        %617 = vperm.xlu0 %616, %v476
        %v618 = vpop.permute.xlu0 %617
        %v620 = vmul.f32 %v618, %v496
        %v621 = vmul.f32 %v618, %v497
        %622 = vset.pattern.permute.xlu0 1
        %623 = vperm.xlu0 %622, %v476
        %v624 = vpop.permute.xlu0 %623
        %v626 = vmul.f32 %v624, %v517
        %v627 = vmul.f32 %v624, %v518
        %v628 = vadd.f32 %v620, %v626
        %v629 = vadd.f32 %v621, %v627
        %630 = vset.pattern.permute.xlu0 2
        %631 = vperm.xlu0 %630, %v476
        %v632 = vpop.permute.xlu0 %631
        %v634 = vmul.f32 %v632, %v538
        %v635 = vmul.f32 %v632, %v539
        %v636 = vadd.f32 %v628, %v634
        %v637 = vadd.f32 %v629, %v635
        %638 = vset.pattern.permute.xlu0 3
        %639 = vperm.xlu0 %638, %v476
        %v640 = vpop.permute.xlu0 %639
        %v642 = vmul.f32 %v640, %v550
        %v643 = vmul.f32 %v640, %v551
        %v644 = vadd.f32 %v636, %v642
        %v645 = vadd.f32 %v637, %v643
        %646 = vset.pattern.permute.xlu0 4
        %647 = vperm.xlu0 %646, %v476
        %v648 = vpop.permute.xlu0 %647
        %v650 = vmul.f32 %v648, %v571
        %v651 = vmul.f32 %v648, %v572
        %v652 = vadd.f32 %v644, %v650
        %v653 = vadd.f32 %v645, %v651
        %654 = vset.pattern.permute.xlu0 5
        %655 = vperm.xlu0 %654, %v476
        %v656 = vpop.permute.xlu0 %655
        %v658 = vmul.f32 %v656, %v592
        %v659 = vmul.f32 %v656, %v593
        %v660 = vadd.f32 %v652, %v658
        %v661 = vadd.f32 %v653, %v659
        %662 = vset.pattern.permute.xlu0 6
        %663 = vperm.xlu0 %662, %v476
        %v664 = vpop.permute.xlu0 %663
        %v666 = vmul.f32 %v664, %v613
        %v667 = vmul.f32 %v664, %v614
        %v668 = vadd.f32 %v660, %v666
        %v669 = vadd.f32 %v661, %v667
        %v670 = vadd.s32 %v474, 4294967293
        %v671 = vadd.s32 %v475, 4294967293
        %vm672 = vcmp.ge.s32.totalorder %v670, 0
        %vm673 = vcmp.ge.s32.totalorder %v671, 0
        %vm674 = vcmp.lt.s32.totalorder %v670, 16
        %vm675 = vcmp.lt.s32.totalorder %v671, 16
        %vm676 = vmand %vm672, %vm674
        %vm677 = vmand %vm673, %vm675
        %678 = vrot.lane.b32.xlu0 %v668, 48
        %v679 = vpop.permute.xlu0 %678
        %680 = vrot.lane.b32.xlu0 %v669, 48
        %v681 = vpop.permute.xlu0 %680
        %vm682 = vcmp.lt.s32.totalorder %v470, 48
        %v683 = vsel %vm682, %v679, %v681
        %v684 = vsel %vm682, %v681, %v679
        %v685 = vsel %vm676, 1, 0
        %v686 = vsel %vm677, 1, 0
        %vm687 = vcmp.eq.s32.totalorder %v685, 1
        %vm688 = vcmp.eq.s32.totalorder %v686, 1
        %v689 = vsel %vm687, %v684, 0.0
        %v690 = vsel %vm688, %v683, 0.0
        %691 = vset.pattern.permute.xlu0 7
        %692 = vperm.xlu0 %691, %v476
        %v693 = vpop.permute.xlu0 %692
        %v695 = vmul.f32 %v693, %v496
        %v696 = vmul.f32 %v693, %v497
        %697 = vset.pattern.permute.xlu0 8
        %698 = vperm.xlu0 %697, %v476
        %v699 = vpop.permute.xlu0 %698
        %v701 = vmul.f32 %v699, %v517
        %v702 = vmul.f32 %v699, %v518
        %v703 = vadd.f32 %v695, %v701
        %v704 = vadd.f32 %v696, %v702
        %705 = vset.pattern.permute.xlu0 9
        %706 = vperm.xlu0 %705, %v476
        %v707 = vpop.permute.xlu0 %706
        %v709 = vmul.f32 %v707, %v538
        %v710 = vmul.f32 %v707, %v539
        %v711 = vadd.f32 %v703, %v709
        %v712 = vadd.f32 %v704, %v710
        %713 = vset.pattern.permute.xlu0 10
        %714 = vperm.xlu0 %713, %v476
        %v715 = vpop.permute.xlu0 %714
        %v717 = vmul.f32 %v715, %v550
        %v718 = vmul.f32 %v715, %v551
        %v719 = vadd.f32 %v711, %v717
        %v720 = vadd.f32 %v712, %v718
        %721 = vset.pattern.permute.xlu0 11
        %722 = vperm.xlu0 %721, %v476
        %v723 = vpop.permute.xlu0 %722
        %v725 = vmul.f32 %v723, %v571
        %v726 = vmul.f32 %v723, %v572
        %v727 = vadd.f32 %v719, %v725
        %v728 = vadd.f32 %v720, %v726
        %729 = vset.pattern.permute.xlu0 12
        %730 = vperm.xlu0 %729, %v476
        %v731 = vpop.permute.xlu0 %730
        %v733 = vmul.f32 %v731, %v592
        %v734 = vmul.f32 %v731, %v593
        %v735 = vadd.f32 %v727, %v733
        %v736 = vadd.f32 %v728, %v734
        %737 = vset.pattern.permute.xlu0 13
        %738 = vperm.xlu0 %737, %v476
        %v739 = vpop.permute.xlu0 %738
        %v741 = vmul.f32 %v739, %v613
        %v742 = vmul.f32 %v739, %v614
        %v743 = vadd.f32 %v735, %v741
        %v744 = vadd.f32 %v736, %v742
        %v745 = vadd.s32 %v474, 4294967294
        %v746 = vadd.s32 %v475, 4294967294
        %vm747 = vcmp.ge.s32.totalorder %v745, 0
        %vm748 = vcmp.ge.s32.totalorder %v746, 0
        %vm749 = vcmp.lt.s32.totalorder %v745, 16
        %vm750 = vcmp.lt.s32.totalorder %v746, 16
        %vm751 = vmand %vm747, %vm749
        %vm752 = vmand %vm748, %vm750
        %753 = vrot.lane.b32.xlu0 %v743, 32
        %v754 = vpop.permute.xlu0 %753
        %755 = vrot.lane.b32.xlu0 %v744, 32
        %v756 = vpop.permute.xlu0 %755
        %vm757 = vcmp.lt.s32.totalorder %v470, 32
        %v758 = vsel %vm757, %v754, %v756
        %v759 = vsel %vm757, %v756, %v754
        %v760 = vsel %vm751, 1, 0
        %v761 = vsel %vm752, 1, 0
        %vm762 = vcmp.eq.s32.totalorder %v760, 1
        %vm763 = vcmp.eq.s32.totalorder %v761, 1
        %v764 = vsel %vm762, %v759, 0.0
        %v765 = vsel %vm763, %v758, 0.0
        %766 = vset.pattern.permute.xlu0 14
        %767 = vperm.xlu0 %766, %v476
        %v768 = vpop.permute.xlu0 %767
        %v770 = vmul.f32 %v768, %v496
        %v771 = vmul.f32 %v768, %v497
        %772 = vset.pattern.permute.xlu0 15
        %773 = vperm.xlu0 %772, %v476
        %v774 = vpop.permute.xlu0 %773
        %v776 = vmul.f32 %v774, %v517
        %v777 = vmul.f32 %v774, %v518
        %v778 = vadd.f32 %v770, %v776
        %v779 = vadd.f32 %v771, %v777
        %780 = vset.pattern.permute.xlu0 16
        %781 = vperm.xlu0 %780, %v476
        %v782 = vpop.permute.xlu0 %781
        %v784 = vmul.f32 %v782, %v538
        %v785 = vmul.f32 %v782, %v539
        %v786 = vadd.f32 %v778, %v784
        %v787 = vadd.f32 %v779, %v785
        %788 = vset.pattern.permute.xlu0 17
        %789 = vperm.xlu0 %788, %v476
        %v790 = vpop.permute.xlu0 %789
        %v792 = vmul.f32 %v790, %v550
        %v793 = vmul.f32 %v790, %v551
        %v794 = vadd.f32 %v786, %v792
        %v795 = vadd.f32 %v787, %v793
        %796 = vset.pattern.permute.xlu0 18
        %797 = vperm.xlu0 %796, %v476
        %v798 = vpop.permute.xlu0 %797
        %v800 = vmul.f32 %v798, %v571
        %v801 = vmul.f32 %v798, %v572
        %v802 = vadd.f32 %v794, %v800
        %v803 = vadd.f32 %v795, %v801
        %804 = vset.pattern.permute.xlu0 19
        %805 = vperm.xlu0 %804, %v476
        %v806 = vpop.permute.xlu0 %805
        %v808 = vmul.f32 %v806, %v592
        %v809 = vmul.f32 %v806, %v593
        %v810 = vadd.f32 %v802, %v808
        %v811 = vadd.f32 %v803, %v809
        %812 = vset.pattern.permute.xlu0 20
        %813 = vperm.xlu0 %812, %v476
        %v814 = vpop.permute.xlu0 %813
        %v816 = vmul.f32 %v814, %v613
        %v817 = vmul.f32 %v814, %v614
        %v818 = vadd.f32 %v810, %v816
        %v819 = vadd.f32 %v811, %v817
        %v820 = vadd.s32 %v474, 4294967295
        %v821 = vadd.s32 %v475, 4294967295
        %vm822 = vcmp.ge.s32.totalorder %v820, 0
        %vm823 = vcmp.ge.s32.totalorder %v821, 0
        %vm824 = vcmp.lt.s32.totalorder %v820, 16
        %vm825 = vcmp.lt.s32.totalorder %v821, 16
        %vm826 = vmand %vm822, %vm824
        %vm827 = vmand %vm823, %vm825
        %828 = vrot.lane.b32.xlu0 %v818, 16
        %v829 = vpop.permute.xlu0 %828
        %830 = vrot.lane.b32.xlu0 %v819, 16
        %v831 = vpop.permute.xlu0 %830
        %vm832 = vcmp.lt.s32.totalorder %v470, 16
        %v833 = vsel %vm832, %v829, %v831
        %v834 = vsel %vm832, %v831, %v829
        %v835 = vsel %vm826, 1, 0
        %v836 = vsel %vm827, 1, 0
        %vm837 = vcmp.eq.s32.totalorder %v835, 1
        %vm838 = vcmp.eq.s32.totalorder %v836, 1
        %v839 = vsel %vm837, %v834, 0.0
        %v840 = vsel %vm838, %v833, 0.0
        %841 = vset.pattern.permute.xlu0 21
        %842 = vperm.xlu0 %841, %v476
        %v843 = vpop.permute.xlu0 %842
        %v845 = vmul.f32 %v843, %v496
        %v846 = vmul.f32 %v843, %v497
        %847 = vset.pattern.permute.xlu0 22
        %848 = vperm.xlu0 %847, %v476
        %v849 = vpop.permute.xlu0 %848
        %v851 = vmul.f32 %v849, %v517
        %v852 = vmul.f32 %v849, %v518
        %v853 = vadd.f32 %v845, %v851
        %v854 = vadd.f32 %v846, %v852
        %855 = vset.pattern.permute.xlu0 23
        %856 = vperm.xlu0 %855, %v476
        %v857 = vpop.permute.xlu0 %856
        %v859 = vmul.f32 %v857, %v538
        %v860 = vmul.f32 %v857, %v539
        %v861 = vadd.f32 %v853, %v859
        %v862 = vadd.f32 %v854, %v860
        %863 = vset.pattern.permute.xlu0 24
        %864 = vperm.xlu0 %863, %v476
        %v865 = vpop.permute.xlu0 %864
        %v867 = vmul.f32 %v865, %v550
        %v868 = vmul.f32 %v865, %v551
        %v869 = vadd.f32 %v861, %v867
        %v870 = vadd.f32 %v862, %v868
        %871 = vset.pattern.permute.xlu0 25
        %872 = vperm.xlu0 %871, %v476
        %v873 = vpop.permute.xlu0 %872
        %v875 = vmul.f32 %v873, %v571
        %v876 = vmul.f32 %v873, %v572
        %v877 = vadd.f32 %v869, %v875
        %v878 = vadd.f32 %v870, %v876
        %879 = vset.pattern.permute.xlu0 26
        %880 = vperm.xlu0 %879, %v476
        %v881 = vpop.permute.xlu0 %880
        %v883 = vmul.f32 %v881, %v592
        %v884 = vmul.f32 %v881, %v593
        %v885 = vadd.f32 %v877, %v883
        %v886 = vadd.f32 %v878, %v884
        %887 = vset.pattern.permute.xlu0 27
        %888 = vperm.xlu0 %887, %v476
        %v889 = vpop.permute.xlu0 %888
        %v891 = vmul.f32 %v889, %v613
        %v892 = vmul.f32 %v889, %v614
        %v893 = vadd.f32 %v885, %v891
        %v894 = vadd.f32 %v886, %v892
        %vm895 = vcmp.ge.s32.totalorder %v474, 0
        %vm896 = vcmp.ge.s32.totalorder %v475, 0
        %vm897 = vcmp.lt.s32.totalorder %v474, 16
        %vm898 = vcmp.lt.s32.totalorder %v475, 16
        %vm899 = vmand %vm895, %vm897
        %vm900 = vmand %vm896, %vm898
        %v901 = vsel %vm899, 1, 0
        %v902 = vsel %vm900, 1, 0
        %vm903 = vcmp.eq.s32.totalorder %v901, 1
        %vm904 = vcmp.eq.s32.totalorder %v902, 1
        %v905 = vsel %vm903, %v893, 0.0
        %v906 = vsel %vm904, %v894, 0.0
        %907 = vset.pattern.permute.xlu0 28
        %908 = vperm.xlu0 %907, %v476
        %v909 = vpop.permute.xlu0 %908
        %v911 = vmul.f32 %v909, %v496
        %v912 = vmul.f32 %v909, %v497
        %913 = vset.pattern.permute.xlu0 29
        %914 = vperm.xlu0 %913, %v476
        %v915 = vpop.permute.xlu0 %914
        %v917 = vmul.f32 %v915, %v517
        %v918 = vmul.f32 %v915, %v518
        %v919 = vadd.f32 %v911, %v917
        %v920 = vadd.f32 %v912, %v918
        %921 = vset.pattern.permute.xlu0 30
        %922 = vperm.xlu0 %921, %v476
        %v923 = vpop.permute.xlu0 %922
        %v925 = vmul.f32 %v923, %v538
        %v926 = vmul.f32 %v923, %v539
        %v927 = vadd.f32 %v919, %v925
        %v928 = vadd.f32 %v920, %v926
        %929 = vset.pattern.permute.xlu0 31
        %930 = vperm.xlu0 %929, %v476
        %v931 = vpop.permute.xlu0 %930
        %v933 = vmul.f32 %v931, %v550
        %v934 = vmul.f32 %v931, %v551
        %v935 = vadd.f32 %v927, %v933
        %v936 = vadd.f32 %v928, %v934
        %937 = vset.pattern.permute.xlu0 32
        %938 = vperm.xlu0 %937, %v476
        %v939 = vpop.permute.xlu0 %938
        %v941 = vmul.f32 %v939, %v571
        %v942 = vmul.f32 %v939, %v572
        %v943 = vadd.f32 %v935, %v941
        %v944 = vadd.f32 %v936, %v942
        %945 = vset.pattern.permute.xlu0 33
        %946 = vperm.xlu0 %945, %v476
        %v947 = vpop.permute.xlu0 %946
        %v949 = vmul.f32 %v947, %v592
        %v950 = vmul.f32 %v947, %v593
        %v951 = vadd.f32 %v943, %v949
        %v952 = vadd.f32 %v944, %v950
        %953 = vset.pattern.permute.xlu0 34
        %954 = vperm.xlu0 %953, %v476
        %v955 = vpop.permute.xlu0 %954
        %v957 = vmul.f32 %v955, %v613
        %v958 = vmul.f32 %v955, %v614
        %v959 = vadd.f32 %v951, %v957
        %v960 = vadd.f32 %v952, %v958
        %v961 = vadd.s32 %v474, 1
        %v962 = vadd.s32 %v475, 1
        %vm963 = vcmp.ge.s32.totalorder %v961, 0
        %vm964 = vcmp.ge.s32.totalorder %v962, 0
        %vm965 = vcmp.lt.s32.totalorder %v961, 16
        %vm966 = vcmp.lt.s32.totalorder %v962, 16
        %vm967 = vmand %vm963, %vm965
        %vm968 = vmand %vm964, %vm966
        %969 = vrot.lane.b32.xlu0 %v959, 112
        %v970 = vpop.permute.xlu0 %969
        %971 = vrot.lane.b32.xlu0 %v960, 112
        %v972 = vpop.permute.xlu0 %971
        %vm973 = vcmp.lt.s32.totalorder %v470, 112
        %v974 = vsel %vm973, %v970, %v972
        %v975 = vsel %vm973, %v972, %v970
        %v976 = vsel %vm967, 1, 0
        %v977 = vsel %vm968, 1, 0
        %vm978 = vcmp.eq.s32.totalorder %v976, 1
        %vm979 = vcmp.eq.s32.totalorder %v977, 1
        %v980 = vsel %vm978, %v974, 0.0
        %v981 = vsel %vm979, %v975, 0.0
        %982 = vset.pattern.permute.xlu0 35
        %983 = vperm.xlu0 %982, %v476
        %v984 = vpop.permute.xlu0 %983
        %v986 = vmul.f32 %v984, %v496
        %v987 = vmul.f32 %v984, %v497
        %988 = vset.pattern.permute.xlu0 36
        %989 = vperm.xlu0 %988, %v476
        %v990 = vpop.permute.xlu0 %989
        %v992 = vmul.f32 %v990, %v517
        %v993 = vmul.f32 %v990, %v518
        %v994 = vadd.f32 %v986, %v992
        %v995 = vadd.f32 %v987, %v993
        %996 = vset.pattern.permute.xlu0 37
        %997 = vperm.xlu0 %996, %v476
        %v998 = vpop.permute.xlu0 %997
        %v1000 = vmul.f32 %v998, %v538
        %v1001 = vmul.f32 %v998, %v539
        %v1002 = vadd.f32 %v994, %v1000
        %v1003 = vadd.f32 %v995, %v1001
        %1004 = vset.pattern.permute.xlu0 38
        %1005 = vperm.xlu0 %1004, %v476
        %v1006 = vpop.permute.xlu0 %1005
        %v1008 = vmul.f32 %v1006, %v550
        %v1009 = vmul.f32 %v1006, %v551
        %v1010 = vadd.f32 %v1002, %v1008
        %v1011 = vadd.f32 %v1003, %v1009
        %1012 = vset.pattern.permute.xlu0 39
        %1013 = vperm.xlu0 %1012, %v476
        %v1014 = vpop.permute.xlu0 %1013
        %v1016 = vmul.f32 %v1014, %v571
        %v1017 = vmul.f32 %v1014, %v572
        %v1018 = vadd.f32 %v1010, %v1016
        %v1019 = vadd.f32 %v1011, %v1017
        %1020 = vset.pattern.permute.xlu0 40
        %1021 = vperm.xlu0 %1020, %v476
        %v1022 = vpop.permute.xlu0 %1021
        %v1024 = vmul.f32 %v1022, %v592
        %v1025 = vmul.f32 %v1022, %v593
        %v1026 = vadd.f32 %v1018, %v1024
        %v1027 = vadd.f32 %v1019, %v1025
        %1028 = vset.pattern.permute.xlu0 41
        %1029 = vperm.xlu0 %1028, %v476
        %v1030 = vpop.permute.xlu0 %1029
        %v1032 = vmul.f32 %v1030, %v613
        %v1033 = vmul.f32 %v1030, %v614
        %v1034 = vadd.f32 %v1026, %v1032
        %v1035 = vadd.f32 %v1027, %v1033
        %v1036 = vadd.s32 %v474, 2
        %v1037 = vadd.s32 %v475, 2
        %vm1038 = vcmp.ge.s32.totalorder %v1036, 0
        %vm1039 = vcmp.ge.s32.totalorder %v1037, 0
        %vm1040 = vcmp.lt.s32.totalorder %v1036, 16
        %vm1041 = vcmp.lt.s32.totalorder %v1037, 16
        %vm1042 = vmand %vm1038, %vm1040
        %vm1043 = vmand %vm1039, %vm1041
        %1044 = vrot.lane.b32.xlu0 %v1034, 96
        %v1045 = vpop.permute.xlu0 %1044
        %1046 = vrot.lane.b32.xlu0 %v1035, 96
        %v1047 = vpop.permute.xlu0 %1046
        %vm1048 = vcmp.lt.s32.totalorder %v470, 96
        %v1049 = vsel %vm1048, %v1045, %v1047
        %v1050 = vsel %vm1048, %v1047, %v1045
        %v1051 = vsel %vm1042, 1, 0
        %v1052 = vsel %vm1043, 1, 0
        %vm1053 = vcmp.eq.s32.totalorder %v1051, 1
        %vm1054 = vcmp.eq.s32.totalorder %v1052, 1
        %v1055 = vsel %vm1053, %v1049, 0.0
        %v1056 = vsel %vm1054, %v1050, 0.0
        %1057 = vset.pattern.permute.xlu0 42
        %1058 = vperm.xlu0 %1057, %v476
        %v1059 = vpop.permute.xlu0 %1058
        %v1061 = vmul.f32 %v1059, %v496
        %v1062 = vmul.f32 %v1059, %v497
        %1063 = vset.pattern.permute.xlu0 43
        %1064 = vperm.xlu0 %1063, %v476
        %v1065 = vpop.permute.xlu0 %1064
        %v1067 = vmul.f32 %v1065, %v517
        %v1068 = vmul.f32 %v1065, %v518
        %v1069 = vadd.f32 %v1061, %v1067
        %v1070 = vadd.f32 %v1062, %v1068
        %1071 = vset.pattern.permute.xlu0 44
        %1072 = vperm.xlu0 %1071, %v476
        %v1073 = vpop.permute.xlu0 %1072
        %v1075 = vmul.f32 %v1073, %v538
        %v1076 = vmul.f32 %v1073, %v539
        %v1077 = vadd.f32 %v1069, %v1075
        %v1078 = vadd.f32 %v1070, %v1076
        %1079 = vset.pattern.permute.xlu0 45
        %1080 = vperm.xlu0 %1079, %v476
        %v1081 = vpop.permute.xlu0 %1080
        %v1083 = vmul.f32 %v1081, %v550
        %v1084 = vmul.f32 %v1081, %v551
        %v1085 = vadd.f32 %v1077, %v1083
        %v1086 = vadd.f32 %v1078, %v1084
        %1087 = vset.pattern.permute.xlu0 46
        %1088 = vperm.xlu0 %1087, %v476
        %v1089 = vpop.permute.xlu0 %1088
        %v1091 = vmul.f32 %v1089, %v571
        %v1092 = vmul.f32 %v1089, %v572
        %v1093 = vadd.f32 %v1085, %v1091
        %v1094 = vadd.f32 %v1086, %v1092
        %1095 = vset.pattern.permute.xlu0 47
        %1096 = vperm.xlu0 %1095, %v476
        %v1097 = vpop.permute.xlu0 %1096
        %v1099 = vmul.f32 %v1097, %v592
        %v1100 = vmul.f32 %v1097, %v593
        %v1101 = vadd.f32 %v1093, %v1099
        %v1102 = vadd.f32 %v1094, %v1100
        %1103 = vset.pattern.permute.xlu0 48
        %1104 = vperm.xlu0 %1103, %v476
        %v1105 = vpop.permute.xlu0 %1104
        %v1107 = vmul.f32 %v1105, %v613
        %v1108 = vmul.f32 %v1105, %v614
        %v1109 = vadd.f32 %v1101, %v1107
        %v1110 = vadd.f32 %v1102, %v1108
        %v1111 = vadd.s32 %v474, 3
        %v1112 = vadd.s32 %v475, 3
        %vm1113 = vcmp.ge.s32.totalorder %v1111, 0
        %vm1114 = vcmp.ge.s32.totalorder %v1112, 0
        %vm1115 = vcmp.lt.s32.totalorder %v1111, 16
        %vm1116 = vcmp.lt.s32.totalorder %v1112, 16
        %vm1117 = vmand %vm1113, %vm1115
        %vm1118 = vmand %vm1114, %vm1116
        %1119 = vrot.lane.b32.xlu0 %v1109, 80
        %v1120 = vpop.permute.xlu0 %1119
        %1121 = vrot.lane.b32.xlu0 %v1110, 80
        %v1122 = vpop.permute.xlu0 %1121
        %vm1123 = vcmp.lt.s32.totalorder %v470, 80
        %v1124 = vsel %vm1123, %v1120, %v1122
        %v1125 = vsel %vm1123, %v1122, %v1120
        %v1126 = vsel %vm1117, 1, 0
        %v1127 = vsel %vm1118, 1, 0
        %vm1128 = vcmp.eq.s32.totalorder %v1126, 1
        %vm1129 = vcmp.eq.s32.totalorder %v1127, 1
        %v1130 = vsel %vm1128, %v1124, 0.0
        %v1131 = vsel %vm1129, %v1125, 0.0
        %v1132 = vadd.f32 %v689, %v764
        %v1133 = vadd.f32 %v690, %v765
        %v1134 = vadd.f32 %v839, %v905
        %v1135 = vadd.f32 %v840, %v906
        %v1136 = vadd.f32 %v1132, %v1134
        %v1137 = vadd.f32 %v1133, %v1135
        %v1138 = vadd.f32 %v980, %v1055
        %v1139 = vadd.f32 %v981, %v1056
        %v1140 = vadd.f32 %v1138, %v1130
        %v1141 = vadd.f32 %v1139, %v1131
        %v1142 = vadd.f32 %v1136, %v1140
        %v1143 = vadd.f32 %v1137, %v1141
        %vm1144 = vcmask 1041408
        %v1145 = vsel %vm1144, %v1142, 0.0
        %v1146 = vrot.slane %v1145, 4
        %v1147 = vadd.f32 %v1145, %v1146
        %v1148 = vrot.slane %v1147, 2
        %v1149 = vadd.f32 %v1147, %v1148
        %v1150 = vrot.slane %v1149, 1
        %v1151 = vadd.f32 %v1149, %v1150
        %v1152 = vsel %vm1144, %v1143, 0.0
        %v1153 = vrot.slane %v1152, 4
        %v1154 = vadd.f32 %v1152, %v1153
        %v1155 = vrot.slane %v1154, 2
        %v1156 = vadd.f32 %v1154, %v1155
        %v1157 = vrot.slane %v1156, 1
        %v1158 = vadd.f32 %v1156, %v1157
        %v1159 = vxor.u32 %v1151, 2147483648
        %v1160 = vxor.u32 %v1158, 2147483648
        %v1161 = vmul.f32 %v1159, 1.442695
        %v1162 = vpow.pop %v1161
        %v1163 = vmul.f32 %v1160, 1.442695
        %v1164 = vpow.pop %v1163
        %v1165 = vadd.f32 %v1162, 1.0
        %v1166 = vadd.f32 %v1164, 1.0
        %v1167 = vrcp.pop %v1165
        %v1168 = vmul.f32 %v1165, %v1167
        %v1169 = vsub.f32 1.0, %v1168
        %v1170 = vmul.f32 %v1167, %v1169
        %v1171 = vadd.f32 %v1167, %v1170
        %vm1172 = vweird.f32 %v1165
        %vm1173 = vweird.f32 %v1167
        %vm1174 = vmor %vm1172, %vm1173
        %v1175 = vsel %vm1174, %v1167, %v1171
        %v1176 = vand.u32 2147483647, %v1165
        %vm1177 = vcmp.eq.f32.partialorder %v1176, 8.507059e+37
        %v1178 = vand.u32 %v1165, 2147483648
        %v1179 = vor.u32 1.1754944e-38, %v1178
        %v1180 = vsel %vm1177, %v1179, %v1175
        %v1181 = vmul.f32 1.0, %v1180
        %v1182 = vrcp.pop %v1166
        %v1183 = vmul.f32 %v1166, %v1182
        %v1184 = vsub.f32 1.0, %v1183
        %v1185 = vmul.f32 %v1182, %v1184
        %v1186 = vadd.f32 %v1182, %v1185
        %vm1187 = vweird.f32 %v1166
        %vm1188 = vweird.f32 %v1182
        %vm1189 = vmor %vm1187, %vm1188
        %v1190 = vsel %vm1189, %v1182, %v1186
        %v1191 = vand.u32 2147483647, %v1166
        %vm1192 = vcmp.eq.f32.partialorder %v1191, 8.507059e+37
        %v1193 = vand.u32 %v1166, 2147483648
        %v1194 = vor.u32 1.1754944e-38, %v1193
        %v1195 = vsel %vm1192, %v1194, %v1190
        %v1196 = vmul.f32 1.0, %v1195
        %v1197 = vmul.f32 %v411, %v1181
        %v1198 = vmul.f32 %v412, %v1196
        %v1199 = vmul.f32 %v413, %v1181
        %v1200 = vmul.f32 %v414, %v1196
        %v1201 = vmul.f32 %v415, %v1181
        %v1202 = vmul.f32 %v416, %v1196
        %v1203 = vmul.f32 %v417, %v1181
        %v1204 = vmul.f32 %v418, %v1196
        %1205 = vst [vmem:[%s217] sm:$0xff] %v1197
        %1206 = vst [vmem:[%s217 + $0x8] sm:$0xff] %v1198
        %1207 = vst [vmem:[%s217 + $0x10] sm:$0xff] %v1199
        %1208 = vst [vmem:[%s217 + $0x18] sm:$0xff] %v1200
        %1209 = vst [vmem:[%s217 + $0x20] sm:$0xff] %v1201
        %1210 = vst [vmem:[%s217 + $0x28] sm:$0xff] %v1202
        %1211 = vst [vmem:[%s217 + $0x30] sm:$0xff] %v1203
        %1212 = vst [vmem:[%s217 + $0x38] sm:$0xff] %v1204
        %s1213 = sand.u32 %s118, 1
        %s1214 = scalar_lea.sflag [#allocation4], %s1213
        %s1215 = sand.u32 %s118, 1
        %s1216 = smul.addr %s1215, 64
        %s1217 = scalar_lea.vmem [#allocation5], %s1216
        // Predicated region
        $region41: #{tpu_custom_call.1} parent=35 // pred_check
          %p1218 = pneg %p128
        $region42: #{tpu_custom_call.1} parent=35 // pred_check_branch
          %1220 = sbr.rel (%p1218) target = $region44
        $region43: #{tpu_custom_call.1} parent=35 // pred_region
          %1222 = vsyncadd %s1214, 0
          %s1223 = smul.addr %s21, 8
          %s1224 = smul.addr %s1223, 8
          %s1225 = scalar_lea.hbm %s4, %s1224
          %s1226 = sshll.u32 %s1217, 4
          %s1227 = int_to_ptr.vmem [resolvable:$true] %s1226
          %s1228 = sshll.u32 %s1225, 4
          %s1229 = int_to_ptr.hbm [resolvable:$true] %s1228
          %1234 = dma.vmem_to_hbm [thread:$0]  %s1227, 1024, %s1229, %s1214, 256, 256, 16
        $region44: #{tpu_custom_call.1} parent=35 // pred_fallthru
          _
      $region36: #{tpu_custom_call.1} parent=5 // pred_fallthru
        _
      %p1235 = scmp.le.s32.totalorder 2, %s16
      // Predicated region
      $region45: #{tpu_custom_call.1} parent=5 // pred_check
        %p1236 = pneg %p1235
      $region46: #{tpu_custom_call.1} parent=5 // pred_check_branch
        %1238 = sbr.rel (%p1236) target = $region48
      $region47: #{tpu_custom_call.1} parent=5 // pred_region
        %s1239 = ssub.s32 %s16, 2
        // Predicated region
        $region49: #{tpu_custom_call.1} parent=47 // pred_check
          %p1240 = pneg %p134
        $region50: #{tpu_custom_call.1} parent=47 // pred_check_branch
          %1242 = sbr.rel (%p1240) target = $region52
        $region51: #{tpu_custom_call.1} parent=47 // pred_region
          %s1243 = sand.u32 %s119, 1
          %s1244 = scalar_lea.sflag [#allocation4], %s1243
          %s1245 = sand.u32 %s119, 1
          %s1246 = smul.addr %s1245, 64
          %s1247 = scalar_lea.vmem [#allocation5], %s1246
          %1249 = dma.done %s1244, 1024
        $region52: #{tpu_custom_call.1} parent=47 // pred_fallthru
          _
      $region48: #{tpu_custom_call.1} parent=5 // pred_fallthru
        _
    $region6: #{tpu_custom_call.1} parent=1 // loop_footer
      %s20 = sadd.s32 1, %s16
    $region7: #{tpu_custom_call.1} parent=1 // loop_footer_branch
      %15 = sbr.rel target = $region3
    $region8: #{tpu_custom_call.1} parent=1 // loop_exit
      _
    %1250 = vsyncpa [#allocation3], 1
    %s1251 = scalar_lea.sflag [#allocation3], 1
    %1252 = vsyncpa %s1251, 1
    %1253 = vsyncpa [#allocation4], 1
    %s1254 = scalar_lea.sflag [#allocation4], 1
    %1255 = vsyncpa %s1254, 1

</llo_original>
